<compile_context>
chip_gen: v5e
topology: v5e:2x2
jax: 0.10.0
libtpu: 0.0.40
codegen_flags: <defaults>
</compile_context>

<pallas_src>
import functools

import jax
import jax.numpy as jnp
from jax.experimental import pallas as pl
from jax.experimental.pallas import tpu as pltpu


# Rows of the packed (12, C) per-channel parameter slab.
_LN1Q_G, _LN1Q_B = 0, 1
_LN1K_G, _LN1K_B = 2, 3
_LN1V_G, _LN1V_B = 4, 5
_PROJ_B, _G1 = 6, 7
_LN2_G, _LN2_B = 8, 9
_FC2_B, _G2 = 10, 11


# ------------------------------ fused kernel ------------------------------- #

def _regressor_block_kernel(xq_ref, xkv_ref, qw_ref, kw_ref, vw_ref, pw_ref,
                            f1w_ref, f1b_ref, f2w_ref, vec_ref,
                            out_ref, attn_ref, *, num_heads, head_dim, eps):
    # Block shapes (per batch element b):
    #   xq (1,N,C)  xkv (1,Nk,C)
    #   qw/kw/vw (C,AHD)  pw (AHD,C)  f1w (C,Hm)  f1b (1,Hm)  f2w (Hm,C)
    #   vec (12,C) packed per-channel params
    #   out (1,N,C)  attn (1,H,N,Nk)
    xq = xq_ref[0]          # (N, C)   -- also the residual input
    xkv = xkv_ref[0]        # (Nk, C)
    vec = vec_ref[...]      # (12, C)

    def row(i):
        return vec[i:i + 1, :]          # (1, C), broadcasts over tokens

    def layer_norm(x, g_row, b_row):
        mu = jnp.mean(x, axis=-1, keepdims=True)
        xc = x - mu
        var = jnp.mean(xc * xc, axis=-1, keepdims=True)
        return xc * jax.lax.rsqrt(var + eps) * row(g_row) + row(b_row)

    # --- norm1_q / norm1_k / norm1_v --------------------------------------- #
    q_in = layer_norm(xq, _LN1Q_G, _LN1Q_B)     # (N, C)
    k_in = layer_norm(xkv, _LN1K_G, _LN1K_B)    # (Nk, C)
    v_in = layer_norm(xkv, _LN1V_G, _LN1V_B)    # (Nk, C)

    # --- q/k/v projections (weights pre-transposed; softmax scale folded in q_w)
    q = jnp.dot(q_in, qw_ref[...], preferred_element_type=jnp.float32)   # (N, AHD)
    k = jnp.dot(k_in, kw_ref[...], preferred_element_type=jnp.float32)   # (Nk, AHD)
    v = jnp.dot(v_in, vw_ref[...], preferred_element_type=jnp.float32)   # (Nk, AHD)

    # --- per-head scaled-dot-product attention ------------------------------ #
    # Contract last dims directly (no explicit transpose of k).
    dn = (((1,), (1,)), ((), ()))
    ctx_heads = []
    for h in range(num_heads):                       # H=4, tiny: static unroll
        sl = slice(h * head_dim, (h + 1) * head_dim)
        qh, kh, vh = q[:, sl], k[:, sl], v[:, sl]    # (N,Dh), (Nk,Dh), (Nk,Dh)
        s = jax.lax.dot_general(qh, kh, dn, preferred_element_type=jnp.float32)  # (N, Nk)
        s = s - jnp.max(s, axis=-1, keepdims=True)
        p = jnp.exp(s)
        # exact reciprocal: the attention map is an output compared at 1e-5
        p = p * pl.reciprocal(jnp.sum(p, axis=-1, keepdims=True), approx=False)
        attn_ref[0, h] = p.astype(attn_ref.dtype)
        ctx_heads.append(jnp.dot(p, vh, preferred_element_type=jnp.float32))  # (N, Dh)
    ctx = jnp.concatenate(ctx_heads, axis=-1)        # (N, AHD), torch head order

    # --- output projection + gamma_1 residual ------------------------------- #
    y = jnp.dot(ctx, pw_ref[...], preferred_element_type=jnp.float32) + row(_PROJ_B)
    xres = xq + row(_G1) * y                          # x_q + gamma_1 * attn_out

    # --- norm2_cross + MLP + gamma_2 residual -------------------------------- #
    z = layer_norm(xres, _LN2_G, _LN2_B)
    h1 = jnp.dot(z, f1w_ref[...], preferred_element_type=jnp.float32) + f1b_ref[...]
    # TODO(synk): torch nn.GELU() default is the exact erf form; using the tanh
    # approximation (EUP-friendly) in both kernel and reference.
    h1 = jax.nn.gelu(h1, approximate=True)
    m = jnp.dot(h1, f2w_ref[...], preferred_element_type=jnp.float32) + row(_FC2_B)
    out_ref[0] = (z + row(_G2) * m).astype(out_ref.dtype)


# ------------------------------ host wrapper ------------------------------- #

def regressor_block_forward(params, x_q, x_kv, num_heads, eps=1e-5):
    """Fused Pallas implementation of RegressorBlock.forward (inference)."""
    B, N, C = x_q.shape
    Nk = x_kv.shape[1]
    all_head_dim = params["q_w"].shape[0]
    head_dim = all_head_dim // num_heads
    scale = head_dim ** (-0.5)
    hidden = params["fc1_w"].shape[0]

    # One-time host prep (fused into the jitted program): pre-transpose weights to
    # (in, out) so the kernel's MXU dots need no in-kernel transpose, fold the
    # softmax scale into q_w, and pack all per-channel vectors into one slab.
    q_wT = (params["q_w"] * scale).T                  # (C, AHD), scale folded
    k_wT = params["k_w"].T                            # (C, AHD)
    v_wT = params["v_w"].T                            # (C, AHD)
    proj_wT = params["proj_w"].T                      # (AHD, C)
    fc1_wT = params["fc1_w"].T                        # (C, Hm)
    fc2_wT = params["fc2_w"].T                        # (Hm, C)
    fc1_b = params["fc1_b"].reshape(1, hidden)        # (1, Hm)
    vec_c = jnp.stack([
        params["ln1q_g"], params["ln1q_b"],
        params["ln1k_g"], params["ln1k_b"],
        params["ln1v_g"], params["ln1v_b"],
        params["proj_b"], params["gamma1"],
        params["ln2_g"], params["ln2_b"],
        params["fc2_b"], params["gamma2"],
    ], axis=0)                                        # (12, C)

    kernel = functools.partial(_regressor_block_kernel,
                               num_heads=num_heads, head_dim=head_dim, eps=eps)

    out, attn = pl.pallas_call(
        kernel,
        grid=(B,),
        out_shape=(
            jax.ShapeDtypeStruct((B, N, C), jnp.float32),
            jax.ShapeDtypeStruct((B, num_heads, N, Nk), jnp.float32),
        ),
        in_specs=[
            pl.BlockSpec((1, N, C), lambda b: (b, 0, 0)),        # x_q
            pl.BlockSpec((1, Nk, C), lambda b: (b, 0, 0)),       # x_kv
            pl.BlockSpec((C, all_head_dim), lambda b: (0, 0)),   # q_wT (scaled)
            pl.BlockSpec((C, all_head_dim), lambda b: (0, 0)),   # k_wT
            pl.BlockSpec((C, all_head_dim), lambda b: (0, 0)),   # v_wT
            pl.BlockSpec((all_head_dim, C), lambda b: (0, 0)),   # proj_wT
            pl.BlockSpec((C, hidden), lambda b: (0, 0)),         # fc1_wT
            pl.BlockSpec((1, hidden), lambda b: (0, 0)),         # fc1_b
            pl.BlockSpec((hidden, C), lambda b: (0, 0)),         # fc2_wT
            pl.BlockSpec((12, C), lambda b: (0, 0)),             # packed vectors
        ],
        out_specs=(
            pl.BlockSpec((1, N, C), lambda b: (b, 0, 0)),
            pl.BlockSpec((1, num_heads, N, Nk), lambda b: (b, 0, 0, 0)),
        ),
        compiler_params=pltpu.CompilerParams(
            dimension_semantics=("parallel",)),      # v7x: one batch per TensorCore
    )(x_q, x_kv, q_wT, k_wT, v_wT, proj_wT, fc1_wT, fc1_b, fc2_wT, vec_c)
    return out, attn


# -------------------------------- reference -------------------------------- #

def reference_forward(params, x_q, x_kv, num_heads, eps=1e-5):
    def ln(x, g, b):
        mu = jnp.mean(x, axis=-1, keepdims=True)
        var = jnp.mean((x - mu) ** 2, axis=-1, keepdims=True)
        return (x - mu) / jnp.sqrt(var + eps) * g + b

    B, N, C = x_q.shape
    all_head_dim = params["q_w"].shape[0]
    head_dim = all_head_dim // num_heads
    scale = head_dim ** (-0.5)

    xq_n = ln(x_q, params["ln1q_g"], params["ln1q_b"])
    xk_n = ln(x_kv, params["ln1k_g"], params["ln1k_b"])
    xv_n = ln(x_kv, params["ln1v_g"], params["ln1v_b"])

    q = (xq_n @ params["q_w"].T).reshape(B, N, num_heads, head_dim).transpose(0, 2, 1, 3)
    k = (xk_n @ params["k_w"].T).reshape(B, -1, num_heads, head_dim).transpose(0, 2, 1, 3)
    v = (xv_n @ params["v_w"].T).reshape(B, -1, num_heads, head_dim).transpose(0, 2, 1, 3)
    attn = jax.nn.softmax((q * scale) @ jnp.swapaxes(k, -2, -1), axis=-1)
    ctx = (attn @ v).transpose(0, 2, 1, 3).reshape(B, N, all_head_dim)
    y = ctx @ params["proj_w"].T + params["proj_b"]

    xres = x_q + params["gamma1"] * y
    z = ln(xres, params["ln2_g"], params["ln2_b"])
    h1 = jax.nn.gelu(z @ params["fc1_w"].T + params["fc1_b"], approximate=True)
    m = h1 @ params["fc2_w"].T + params["fc2_b"]
    out = z + params["gamma2"] * m
    return out, attn


# ---------------------------------- main ----------------------------------- #

if __name__ == "__main__":
    # Module config: dim=32, num_heads=4 (head_dim=8), mlp_ratio=4, qkv_bias=False.
    dim, num_heads, mlp_ratio = 32, 4, 4.0
    head_dim = dim // num_heads
    all_head_dim = head_dim * num_heads
    hidden = int(dim * mlp_ratio)
    B, N, N_kv = 2, 8, 16

    key = jax.random.PRNGKey(0)
    ks = jax.random.split(key, 21)

    x_q = jax.random.normal(ks[0], (B, N, dim), dtype=jnp.float32)
    x_kv = jax.random.normal(ks[1], (B, N_kv, dim), dtype=jnp.float32)

    def w(k, shape, s=0.05):
        return jax.random.normal(k, shape, dtype=jnp.float32) * s

    params = {
        # LayerNorm affine params (norm1_q / norm1_k / norm1_v / norm2_cross)
        "ln1q_g": 1.0 + w(ks[2], (dim,)), "ln1q_b": w(ks[3], (dim,)),
        "ln1k_g": 1.0 + w(ks[4], (dim,)), "ln1k_b": w(ks[5], (dim,)),
        "ln1v_g": 1.0 + w(ks[6], (dim,)), "ln1v_b": w(ks[7], (dim,)),
        "ln2_g": 1.0 + w(ks[8], (dim,)), "ln2_b": w(ks[9], (dim,)),
        # CrossAttention linears, torch nn.Linear (out, in) layout
        "q_w": w(ks[10], (all_head_dim, dim)),
        "k_w": w(ks[11], (all_head_dim, dim)),
        "v_w": w(ks[12], (all_head_dim, dim)),
        "proj_w": w(ks[13], (dim, all_head_dim)),
        "proj_b": w(ks[14], (dim,)),
        # Mlp
        "fc1_w": w(ks[15], (hidden, dim)),
        "fc1_b": w(ks[16], (hidden,)),
        "fc2_w": w(ks[17], (dim, hidden)),
        "fc2_b": w(ks[18], (dim,)),
        # gamma_1_cross / gamma_2_cross (init_values path)
        "gamma1": 0.1 + w(ks[19], (dim,)),
        "gamma2": 0.1 + w(ks[20], (dim,)),
    }

    fwd = jax.jit(regressor_block_forward, static_argnums=(3,))
    out, attn_map = fwd(params, x_q, x_kv, num_heads)
    out = jax.block_until_ready(out)
    attn_map = jax.block_until_ready(attn_map)

    out_ref, attn_ref = reference_forward(params, x_q, x_kv, num_heads)
    assert out.shape == (B, N, dim)
    assert attn_map.shape == (B, num_heads, N, N_kv)
    assert jnp.allclose(out, out_ref, atol=1e-4, rtol=1e-4)
    assert jnp.allclose(attn_map, attn_ref, atol=1e-5, rtol=1e-5)

    print("KERNEL_OK")
</pallas_src>

<mosaic_0001>
module attributes {stable_mosaic.version = 11 : i64} {
  func.func @_regressor_block_kernel(%arg0: i32, %arg1: memref<1x8x32xf32, #tpu.memory_space<vmem>>, %arg2: memref<1x16x32xf32, #tpu.memory_space<vmem>>, %arg3: memref<32x32xf32, #tpu.memory_space<vmem>>, %arg4: memref<32x32xf32, #tpu.memory_space<vmem>>, %arg5: memref<32x32xf32, #tpu.memory_space<vmem>>, %arg6: memref<32x32xf32, #tpu.memory_space<vmem>>, %arg7: memref<32x128xf32, #tpu.memory_space<vmem>>, %arg8: memref<1x128xf32, #tpu.memory_space<vmem>>, %arg9: memref<128x32xf32, #tpu.memory_space<vmem>>, %arg10: memref<12x32xf32, #tpu.memory_space<vmem>>, %arg11: memref<1x8x32xf32, #tpu.memory_space<vmem>>, %arg12: memref<1x4x8x16xf32, #tpu.memory_space<vmem>>) attributes {dimension_semantics = [#tpu.dimension_semantics<parallel>], iteration_bounds = array<i64: 2>, scalar_prefetch = 0 : i64, scratch_operands = 0 : i64, tpu.core_type = #tpu.core_type<tc>, window_params = [{transform_indices = @transform_0, window_bounds = array<i64: 1, 8, 32>}, {transform_indices = @transform_1, window_bounds = array<i64: 1, 16, 32>}, {pipeline_mode = #tpu.pipeline_mode<synchronous>, transform_indices = @transform_2, window_bounds = array<i64: 32, 32>}, {pipeline_mode = #tpu.pipeline_mode<synchronous>, transform_indices = @transform_3, window_bounds = array<i64: 32, 32>}, {pipeline_mode = #tpu.pipeline_mode<synchronous>, transform_indices = @transform_4, window_bounds = array<i64: 32, 32>}, {pipeline_mode = #tpu.pipeline_mode<synchronous>, transform_indices = @transform_5, window_bounds = array<i64: 32, 32>}, {pipeline_mode = #tpu.pipeline_mode<synchronous>, transform_indices = @transform_6, window_bounds = array<i64: 32, 128>}, {pipeline_mode = #tpu.pipeline_mode<synchronous>, transform_indices = @transform_7, window_bounds = array<i64: 1, 128>}, {pipeline_mode = #tpu.pipeline_mode<synchronous>, transform_indices = @transform_8, window_bounds = array<i64: 128, 32>}, {pipeline_mode = #tpu.pipeline_mode<synchronous>, transform_indices = @transform_9, window_bounds = array<i64: 12, 32>}, {transform_indices = @transform_10, window_bounds = array<i64: 1, 8, 32>}, {transform_indices = @transform_11, window_bounds = array<i64: 1, 4, 8, 16>}]} {
    %c0 = arith.constant 0 : index
    %c0_0 = arith.constant 0 : index
    %c0_1 = arith.constant 0 : index
    %0 = vector.load %arg1[%c0, %c0_0, %c0_1] : memref<1x8x32xf32, #tpu.memory_space<vmem>>, vector<1x8x32xf32>
    %1 = vector.shape_cast %0 : vector<1x8x32xf32> to vector<8x32xf32>
    %c0_2 = arith.constant 0 : index
    %c0_3 = arith.constant 0 : index
    %c0_4 = arith.constant 0 : index
    %2 = vector.load %arg2[%c0_2, %c0_3, %c0_4] : memref<1x16x32xf32, #tpu.memory_space<vmem>>, vector<1x16x32xf32>
    %3 = vector.shape_cast %2 : vector<1x16x32xf32> to vector<16x32xf32>
    %c0_5 = arith.constant 0 : index
    %c0_6 = arith.constant 0 : index
    %4 = vector.load %arg10[%c0_5, %c0_6] : memref<12x32xf32, #tpu.memory_space<vmem>>, vector<12x32xf32>
    %cst = arith.constant dense<0.000000e+00> : vector<8xf32>
    %5 = vector.multi_reduction <add>, %1, %cst [1] : vector<8x32xf32> to vector<8xf32>
    %6 = vector.shape_cast %5 : vector<8xf32> to vector<8x1xf32>
    %cst_7 = arith.constant 3.200000e+01 : f32
    %7 = vector.broadcast %cst_7 : f32 to vector<8x1xf32>
    %8 = arith.divf %6, %7 : vector<8x1xf32>
    %9 = vector.broadcast %8 : vector<8x1xf32> to vector<8x32xf32>
    %10 = arith.subf %1, %9 : vector<8x32xf32>
    %11 = arith.mulf %10, %10 : vector<8x32xf32>
    %cst_8 = arith.constant dense<0.000000e+00> : vector<8xf32>
    %12 = vector.multi_reduction <add>, %11, %cst_8 [1] : vector<8x32xf32> to vector<8xf32>
    %13 = vector.shape_cast %12 : vector<8xf32> to vector<8x1xf32>
    %cst_9 = arith.constant 3.200000e+01 : f32
    %14 = vector.broadcast %cst_9 : f32 to vector<8x1xf32>
    %15 = arith.divf %13, %14 : vector<8x1xf32>
    %cst_10 = arith.constant 9.99999974E-6 : f32
    %16 = vector.broadcast %cst_10 : f32 to vector<8x1xf32>
    %17 = arith.addf %15, %16 : vector<8x1xf32>
    %18 = math.rsqrt %17 : vector<8x1xf32>
    %19 = vector.broadcast %18 : vector<8x1xf32> to vector<8x32xf32>
    %20 = arith.mulf %10, %19 : vector<8x32xf32>
    %21 = vector.extract_strided_slice %4 {offsets = [0, 0], sizes = [1, 32], strides = [1, 1]} : vector<12x32xf32> to vector<1x32xf32>
    %22 = vector.broadcast %21 : vector<1x32xf32> to vector<8x32xf32>
    %23 = arith.mulf %20, %22 : vector<8x32xf32>
    %24 = vector.extract_strided_slice %4 {offsets = [1, 0], sizes = [1, 32], strides = [1, 1]} : vector<12x32xf32> to vector<1x32xf32>
    %25 = vector.broadcast %24 : vector<1x32xf32> to vector<8x32xf32>
    %26 = arith.addf %23, %25 : vector<8x32xf32>
    %cst_11 = arith.constant dense<0.000000e+00> : vector<16xf32>
    %27 = vector.multi_reduction <add>, %3, %cst_11 [1] : vector<16x32xf32> to vector<16xf32>
    %28 = vector.shape_cast %27 : vector<16xf32> to vector<16x1xf32>
    %cst_12 = arith.constant 3.200000e+01 : f32
    %29 = vector.broadcast %cst_12 : f32 to vector<16x1xf32>
    %30 = arith.divf %28, %29 : vector<16x1xf32>
    %31 = vector.broadcast %30 : vector<16x1xf32> to vector<16x32xf32>
    %32 = arith.subf %3, %31 : vector<16x32xf32>
    %33 = arith.mulf %32, %32 : vector<16x32xf32>
    %cst_13 = arith.constant dense<0.000000e+00> : vector<16xf32>
    %34 = vector.multi_reduction <add>, %33, %cst_13 [1] : vector<16x32xf32> to vector<16xf32>
    %35 = vector.shape_cast %34 : vector<16xf32> to vector<16x1xf32>
    %cst_14 = arith.constant 3.200000e+01 : f32
    %36 = vector.broadcast %cst_14 : f32 to vector<16x1xf32>
    %37 = arith.divf %35, %36 : vector<16x1xf32>
    %cst_15 = arith.constant 9.99999974E-6 : f32
    %38 = vector.broadcast %cst_15 : f32 to vector<16x1xf32>
    %39 = arith.addf %37, %38 : vector<16x1xf32>
    %40 = math.rsqrt %39 : vector<16x1xf32>
    %41 = vector.broadcast %40 : vector<16x1xf32> to vector<16x32xf32>
    %42 = arith.mulf %32, %41 : vector<16x32xf32>
    %43 = vector.extract_strided_slice %4 {offsets = [2, 0], sizes = [1, 32], strides = [1, 1]} : vector<12x32xf32> to vector<1x32xf32>
    %44 = vector.broadcast %43 : vector<1x32xf32> to vector<16x32xf32>
    %45 = arith.mulf %42, %44 : vector<16x32xf32>
    %46 = vector.extract_strided_slice %4 {offsets = [3, 0], sizes = [1, 32], strides = [1, 1]} : vector<12x32xf32> to vector<1x32xf32>
    %47 = vector.broadcast %46 : vector<1x32xf32> to vector<16x32xf32>
    %48 = arith.addf %45, %47 : vector<16x32xf32>
    %cst_16 = arith.constant dense<0.000000e+00> : vector<16xf32>
    %49 = vector.multi_reduction <add>, %3, %cst_16 [1] : vector<16x32xf32> to vector<16xf32>
    %50 = vector.shape_cast %49 : vector<16xf32> to vector<16x1xf32>
    %cst_17 = arith.constant 3.200000e+01 : f32
    %51 = vector.broadcast %cst_17 : f32 to vector<16x1xf32>
    %52 = arith.divf %50, %51 : vector<16x1xf32>
    %53 = vector.broadcast %52 : vector<16x1xf32> to vector<16x32xf32>
    %54 = arith.subf %3, %53 : vector<16x32xf32>
    %55 = arith.mulf %54, %54 : vector<16x32xf32>
    %cst_18 = arith.constant dense<0.000000e+00> : vector<16xf32>
    %56 = vector.multi_reduction <add>, %55, %cst_18 [1] : vector<16x32xf32> to vector<16xf32>
    %57 = vector.shape_cast %56 : vector<16xf32> to vector<16x1xf32>
    %cst_19 = arith.constant 3.200000e+01 : f32
    %58 = vector.broadcast %cst_19 : f32 to vector<16x1xf32>
    %59 = arith.divf %57, %58 : vector<16x1xf32>
    %cst_20 = arith.constant 9.99999974E-6 : f32
    %60 = vector.broadcast %cst_20 : f32 to vector<16x1xf32>
    %61 = arith.addf %59, %60 : vector<16x1xf32>
    %62 = math.rsqrt %61 : vector<16x1xf32>
    %63 = vector.broadcast %62 : vector<16x1xf32> to vector<16x32xf32>
    %64 = arith.mulf %54, %63 : vector<16x32xf32>
    %65 = vector.extract_strided_slice %4 {offsets = [4, 0], sizes = [1, 32], strides = [1, 1]} : vector<12x32xf32> to vector<1x32xf32>
    %66 = vector.broadcast %65 : vector<1x32xf32> to vector<16x32xf32>
    %67 = arith.mulf %64, %66 : vector<16x32xf32>
    %68 = vector.extract_strided_slice %4 {offsets = [5, 0], sizes = [1, 32], strides = [1, 1]} : vector<12x32xf32> to vector<1x32xf32>
    %69 = vector.broadcast %68 : vector<1x32xf32> to vector<16x32xf32>
    %70 = arith.addf %67, %69 : vector<16x32xf32>
    %c0_21 = arith.constant 0 : index
    %c0_22 = arith.constant 0 : index
    %71 = vector.load %arg3[%c0_21, %c0_22] : memref<32x32xf32, #tpu.memory_space<vmem>>, vector<32x32xf32>
    %cst_23 = arith.constant dense<0.000000e+00> : vector<8x32xf32>
    %72 = tpu.matmul %26, %71, %cst_23 {dimension_numbers = #tpu.dot_dimension_numbers<[1], [0], [0], [1], [0, 0, 1, 1], [], []>} : vector<8x32xf32>, vector<32x32xf32>, vector<8x32xf32> -> vector<8x32xf32>
    %c0_24 = arith.constant 0 : index
    %c0_25 = arith.constant 0 : index
    %73 = vector.load %arg4[%c0_24, %c0_25] : memref<32x32xf32, #tpu.memory_space<vmem>>, vector<32x32xf32>
    %cst_26 = arith.constant dense<0.000000e+00> : vector<16x32xf32>
    %74 = tpu.matmul %48, %73, %cst_26 {dimension_numbers = #tpu.dot_dimension_numbers<[1], [0], [0], [1], [0, 0, 1, 1], [], []>} : vector<16x32xf32>, vector<32x32xf32>, vector<16x32xf32> -> vector<16x32xf32>
    %c0_27 = arith.constant 0 : index
    %c0_28 = arith.constant 0 : index
    %75 = vector.load %arg5[%c0_27, %c0_28] : memref<32x32xf32, #tpu.memory_space<vmem>>, vector<32x32xf32>
    %cst_29 = arith.constant dense<0.000000e+00> : vector<16x32xf32>
    %76 = tpu.matmul %70, %75, %cst_29 {dimension_numbers = #tpu.dot_dimension_numbers<[1], [0], [0], [1], [0, 0, 1, 1], [], []>} : vector<16x32xf32>, vector<32x32xf32>, vector<16x32xf32> -> vector<16x32xf32>
    %77 = vector.extract_strided_slice %72 {offsets = [0, 0], sizes = [8, 8], strides = [1, 1]} : vector<8x32xf32> to vector<8x8xf32>
    %78 = vector.extract_strided_slice %74 {offsets = [0, 0], sizes = [16, 8], strides = [1, 1]} : vector<16x32xf32> to vector<16x8xf32>
    %79 = vector.extract_strided_slice %76 {offsets = [0, 0], sizes = [16, 8], strides = [1, 1]} : vector<16x32xf32> to vector<16x8xf32>
    %cst_30 = arith.constant dense<0.000000e+00> : vector<8x16xf32>
    %80 = tpu.matmul %77, %78, %cst_30 {dimension_numbers = #tpu.dot_dimension_numbers<[1], [1], [0], [0], [0, 0, 1, 0], [], []>} : vector<8x8xf32>, vector<16x8xf32>, vector<8x16xf32> -> vector<8x16xf32>
    %cst_31 = arith.constant dense<0xFF800000> : vector<8xf32>
    %81 = vector.multi_reduction <maximumf>, %80, %cst_31 [1] : vector<8x16xf32> to vector<8xf32>
    %82 = vector.shape_cast %81 : vector<8xf32> to vector<8x1xf32>
    %83 = vector.broadcast %82 : vector<8x1xf32> to vector<8x16xf32>
    %84 = arith.subf %80, %83 : vector<8x16xf32>
    %85 = math.exp %84 : vector<8x16xf32>
    %cst_32 = arith.constant dense<0.000000e+00> : vector<8xf32>
    %86 = vector.multi_reduction <add>, %85, %cst_32 [1] : vector<8x16xf32> to vector<8xf32>
    %87 = vector.shape_cast %86 : vector<8xf32> to vector<8x1xf32>
    %88 = tpu.reciprocal %87 : vector<8x1xf32> -> vector<8x1xf32>
    %89 = vector.broadcast %88 : vector<8x1xf32> to vector<8x16xf32>
    %90 = arith.mulf %85, %89 : vector<8x16xf32>
    %c0_33 = arith.constant 0 : index
    %c0_34 = arith.constant 0 : index
    %c0_35 = arith.constant 0 : index
    %c0_36 = arith.constant 0 : index
    %91 = vector.load %arg12[%c0_33, %c0_34, %c0_35, %c0_36] : memref<1x4x8x16xf32, #tpu.memory_space<vmem>>, vector<1x1x8x16xf32>
    %92 = vector.shape_cast %91 : vector<1x1x8x16xf32> to vector<8x16xf32>
    %93 = vector.shape_cast %90 : vector<8x16xf32> to vector<1x1x8x16xf32>
    tpu.vector_store %arg12[%c0_33, %c0_34, %c0_35, %c0_36], %93 {strides = array<i32>} : memref<1x4x8x16xf32, #tpu.memory_space<vmem>>, vector<1x1x8x16xf32>,
    %cst_37 = arith.constant dense<0.000000e+00> : vector<8x8xf32>
    %94 = tpu.matmul %90, %79, %cst_37 {dimension_numbers = #tpu.dot_dimension_numbers<[1], [0], [0], [1], [0, 0, 1, 1], [], []>} : vector<8x16xf32>, vector<16x8xf32>, vector<8x8xf32> -> vector<8x8xf32>
    %95 = vector.extract_strided_slice %72 {offsets = [0, 8], sizes = [8, 8], strides = [1, 1]} : vector<8x32xf32> to vector<8x8xf32>
    %96 = vector.extract_strided_slice %74 {offsets = [0, 8], sizes = [16, 8], strides = [1, 1]} : vector<16x32xf32> to vector<16x8xf32>
    %97 = vector.extract_strided_slice %76 {offsets = [0, 8], sizes = [16, 8], strides = [1, 1]} : vector<16x32xf32> to vector<16x8xf32>
    %cst_38 = arith.constant dense<0.000000e+00> : vector<8x16xf32>
    %98 = tpu.matmul %95, %96, %cst_38 {dimension_numbers = #tpu.dot_dimension_numbers<[1], [1], [0], [0], [0, 0, 1, 0], [], []>} : vector<8x8xf32>, vector<16x8xf32>, vector<8x16xf32> -> vector<8x16xf32>
    %cst_39 = arith.constant dense<0xFF800000> : vector<8xf32>
    %99 = vector.multi_reduction <maximumf>, %98, %cst_39 [1] : vector<8x16xf32> to vector<8xf32>
    %100 = vector.shape_cast %99 : vector<8xf32> to vector<8x1xf32>
    %101 = vector.broadcast %100 : vector<8x1xf32> to vector<8x16xf32>
    %102 = arith.subf %98, %101 : vector<8x16xf32>
    %103 = math.exp %102 : vector<8x16xf32>
    %cst_40 = arith.constant dense<0.000000e+00> : vector<8xf32>
    %104 = vector.multi_reduction <add>, %103, %cst_40 [1] : vector<8x16xf32> to vector<8xf32>
    %105 = vector.shape_cast %104 : vector<8xf32> to vector<8x1xf32>
    %106 = tpu.reciprocal %105 : vector<8x1xf32> -> vector<8x1xf32>
    %107 = vector.broadcast %106 : vector<8x1xf32> to vector<8x16xf32>
    %108 = arith.mulf %103, %107 : vector<8x16xf32>
    %c0_41 = arith.constant 0 : index
    %c1 = arith.constant 1 : index
    %c0_42 = arith.constant 0 : index
    %c0_43 = arith.constant 0 : index
    %109 = vector.load %arg12[%c0_41, %c1, %c0_42, %c0_43] : memref<1x4x8x16xf32, #tpu.memory_space<vmem>>, vector<1x1x8x16xf32>
    %110 = vector.shape_cast %109 : vector<1x1x8x16xf32> to vector<8x16xf32>
    %111 = vector.shape_cast %108 : vector<8x16xf32> to vector<1x1x8x16xf32>
    tpu.vector_store %arg12[%c0_41, %c1, %c0_42, %c0_43], %111 {strides = array<i32>} : memref<1x4x8x16xf32, #tpu.memory_space<vmem>>, vector<1x1x8x16xf32>,
    %cst_44 = arith.constant dense<0.000000e+00> : vector<8x8xf32>
    %112 = tpu.matmul %108, %97, %cst_44 {dimension_numbers = #tpu.dot_dimension_numbers<[1], [0], [0], [1], [0, 0, 1, 1], [], []>} : vector<8x16xf32>, vector<16x8xf32>, vector<8x8xf32> -> vector<8x8xf32>
    %113 = vector.extract_strided_slice %72 {offsets = [0, 16], sizes = [8, 8], strides = [1, 1]} : vector<8x32xf32> to vector<8x8xf32>
    %114 = vector.extract_strided_slice %74 {offsets = [0, 16], sizes = [16, 8], strides = [1, 1]} : vector<16x32xf32> to vector<16x8xf32>
    %115 = vector.extract_strided_slice %76 {offsets = [0, 16], sizes = [16, 8], strides = [1, 1]} : vector<16x32xf32> to vector<16x8xf32>
    %cst_45 = arith.constant dense<0.000000e+00> : vector<8x16xf32>
    %116 = tpu.matmul %113, %114, %cst_45 {dimension_numbers = #tpu.dot_dimension_numbers<[1], [1], [0], [0], [0, 0, 1, 0], [], []>} : vector<8x8xf32>, vector<16x8xf32>, vector<8x16xf32> -> vector<8x16xf32>
    %cst_46 = arith.constant dense<0xFF800000> : vector<8xf32>
    %117 = vector.multi_reduction <maximumf>, %116, %cst_46 [1] : vector<8x16xf32> to vector<8xf32>
    %118 = vector.shape_cast %117 : vector<8xf32> to vector<8x1xf32>
    %119 = vector.broadcast %118 : vector<8x1xf32> to vector<8x16xf32>
    %120 = arith.subf %116, %119 : vector<8x16xf32>
    %121 = math.exp %120 : vector<8x16xf32>
    %cst_47 = arith.constant dense<0.000000e+00> : vector<8xf32>
    %122 = vector.multi_reduction <add>, %121, %cst_47 [1] : vector<8x16xf32> to vector<8xf32>
    %123 = vector.shape_cast %122 : vector<8xf32> to vector<8x1xf32>
    %124 = tpu.reciprocal %123 : vector<8x1xf32> -> vector<8x1xf32>
    %125 = vector.broadcast %124 : vector<8x1xf32> to vector<8x16xf32>
    %126 = arith.mulf %121, %125 : vector<8x16xf32>
    %c0_48 = arith.constant 0 : index
    %c2 = arith.constant 2 : index
    %c0_49 = arith.constant 0 : index
    %c0_50 = arith.constant 0 : index
    %127 = vector.load %arg12[%c0_48, %c2, %c0_49, %c0_50] : memref<1x4x8x16xf32, #tpu.memory_space<vmem>>, vector<1x1x8x16xf32>
    %128 = vector.shape_cast %127 : vector<1x1x8x16xf32> to vector<8x16xf32>
    %129 = vector.shape_cast %126 : vector<8x16xf32> to vector<1x1x8x16xf32>
    tpu.vector_store %arg12[%c0_48, %c2, %c0_49, %c0_50], %129 {strides = array<i32>} : memref<1x4x8x16xf32, #tpu.memory_space<vmem>>, vector<1x1x8x16xf32>,
    %cst_51 = arith.constant dense<0.000000e+00> : vector<8x8xf32>
    %130 = tpu.matmul %126, %115, %cst_51 {dimension_numbers = #tpu.dot_dimension_numbers<[1], [0], [0], [1], [0, 0, 1, 1], [], []>} : vector<8x16xf32>, vector<16x8xf32>, vector<8x8xf32> -> vector<8x8xf32>
    %131 = vector.extract_strided_slice %72 {offsets = [0, 24], sizes = [8, 8], strides = [1, 1]} : vector<8x32xf32> to vector<8x8xf32>
    %132 = vector.extract_strided_slice %74 {offsets = [0, 24], sizes = [16, 8], strides = [1, 1]} : vector<16x32xf32> to vector<16x8xf32>
    %133 = vector.extract_strided_slice %76 {offsets = [0, 24], sizes = [16, 8], strides = [1, 1]} : vector<16x32xf32> to vector<16x8xf32>
    %cst_52 = arith.constant dense<0.000000e+00> : vector<8x16xf32>
    %134 = tpu.matmul %131, %132, %cst_52 {dimension_numbers = #tpu.dot_dimension_numbers<[1], [1], [0], [0], [0, 0, 1, 0], [], []>} : vector<8x8xf32>, vector<16x8xf32>, vector<8x16xf32> -> vector<8x16xf32>
    %cst_53 = arith.constant dense<0xFF800000> : vector<8xf32>
    %135 = vector.multi_reduction <maximumf>, %134, %cst_53 [1] : vector<8x16xf32> to vector<8xf32>
    %136 = vector.shape_cast %135 : vector<8xf32> to vector<8x1xf32>
    %137 = vector.broadcast %136 : vector<8x1xf32> to vector<8x16xf32>
    %138 = arith.subf %134, %137 : vector<8x16xf32>
    %139 = math.exp %138 : vector<8x16xf32>
    %cst_54 = arith.constant dense<0.000000e+00> : vector<8xf32>
    %140 = vector.multi_reduction <add>, %139, %cst_54 [1] : vector<8x16xf32> to vector<8xf32>
    %141 = vector.shape_cast %140 : vector<8xf32> to vector<8x1xf32>
    %142 = tpu.reciprocal %141 : vector<8x1xf32> -> vector<8x1xf32>
    %143 = vector.broadcast %142 : vector<8x1xf32> to vector<8x16xf32>
    %144 = arith.mulf %139, %143 : vector<8x16xf32>
    %c0_55 = arith.constant 0 : index
    %c3 = arith.constant 3 : index
    %c0_56 = arith.constant 0 : index
    %c0_57 = arith.constant 0 : index
    %145 = vector.load %arg12[%c0_55, %c3, %c0_56, %c0_57] : memref<1x4x8x16xf32, #tpu.memory_space<vmem>>, vector<1x1x8x16xf32>
    %146 = vector.shape_cast %145 : vector<1x1x8x16xf32> to vector<8x16xf32>
    %147 = vector.shape_cast %144 : vector<8x16xf32> to vector<1x1x8x16xf32>
    tpu.vector_store %arg12[%c0_55, %c3, %c0_56, %c0_57], %147 {strides = array<i32>} : memref<1x4x8x16xf32, #tpu.memory_space<vmem>>, vector<1x1x8x16xf32>,
    %cst_58 = arith.constant dense<0.000000e+00> : vector<8x8xf32>
    %148 = tpu.matmul %144, %133, %cst_58 {dimension_numbers = #tpu.dot_dimension_numbers<[1], [0], [0], [1], [0, 0, 1, 1], [], []>} : vector<8x16xf32>, vector<16x8xf32>, vector<8x8xf32> -> vector<8x8xf32>
    %149 = tpu.concatenate %94, %112, %130, %148 in 1 : vector<8x8xf32>, vector<8x8xf32>, vector<8x8xf32>, vector<8x8xf32> -> vector<8x32xf32>
    %c0_59 = arith.constant 0 : index
    %c0_60 = arith.constant 0 : index
    %150 = vector.load %arg6[%c0_59, %c0_60] : memref<32x32xf32, #tpu.memory_space<vmem>>, vector<32x32xf32>
    %cst_61 = arith.constant dense<0.000000e+00> : vector<8x32xf32>
    %151 = tpu.matmul %149, %150, %cst_61 {dimension_numbers = #tpu.dot_dimension_numbers<[1], [0], [0], [1], [0, 0, 1, 1], [], []>} : vector<8x32xf32>, vector<32x32xf32>, vector<8x32xf32> -> vector<8x32xf32>
    %152 = vector.extract_strided_slice %4 {offsets = [6, 0], sizes = [1, 32], strides = [1, 1]} : vector<12x32xf32> to vector<1x32xf32>
    %153 = vector.broadcast %152 : vector<1x32xf32> to vector<8x32xf32>
    %154 = arith.addf %151, %153 : vector<8x32xf32>
    %155 = vector.extract_strided_slice %4 {offsets = [7, 0], sizes = [1, 32], strides = [1, 1]} : vector<12x32xf32> to vector<1x32xf32>
    %156 = vector.broadcast %155 : vector<1x32xf32> to vector<8x32xf32>
    %157 = arith.mulf %156, %154 : vector<8x32xf32>
    %158 = arith.addf %1, %157 : vector<8x32xf32>
    %cst_62 = arith.constant dense<0.000000e+00> : vector<8xf32>
    %159 = vector.multi_reduction <add>, %158, %cst_62 [1] : vector<8x32xf32> to vector<8xf32>
    %160 = vector.shape_cast %159 : vector<8xf32> to vector<8x1xf32>
    %cst_63 = arith.constant 3.200000e+01 : f32
    %161 = vector.broadcast %cst_63 : f32 to vector<8x1xf32>
    %162 = arith.divf %160, %161 : vector<8x1xf32>
    %163 = vector.broadcast %162 : vector<8x1xf32> to vector<8x32xf32>
    %164 = arith.subf %158, %163 : vector<8x32xf32>
    %165 = arith.mulf %164, %164 : vector<8x32xf32>
    %cst_64 = arith.constant dense<0.000000e+00> : vector<8xf32>
    %166 = vector.multi_reduction <add>, %165, %cst_64 [1] : vector<8x32xf32> to vector<8xf32>
    %167 = vector.shape_cast %166 : vector<8xf32> to vector<8x1xf32>
    %cst_65 = arith.constant 3.200000e+01 : f32
    %168 = vector.broadcast %cst_65 : f32 to vector<8x1xf32>
    %169 = arith.divf %167, %168 : vector<8x1xf32>
    %cst_66 = arith.constant 9.99999974E-6 : f32
    %170 = vector.broadcast %cst_66 : f32 to vector<8x1xf32>
    %171 = arith.addf %169, %170 : vector<8x1xf32>
    %172 = math.rsqrt %171 : vector<8x1xf32>
    %173 = vector.broadcast %172 : vector<8x1xf32> to vector<8x32xf32>
    %174 = arith.mulf %164, %173 : vector<8x32xf32>
    %175 = vector.extract_strided_slice %4 {offsets = [8, 0], sizes = [1, 32], strides = [1, 1]} : vector<12x32xf32> to vector<1x32xf32>
    %176 = vector.broadcast %175 : vector<1x32xf32> to vector<8x32xf32>
    %177 = arith.mulf %174, %176 : vector<8x32xf32>
    %178 = vector.extract_strided_slice %4 {offsets = [9, 0], sizes = [1, 32], strides = [1, 1]} : vector<12x32xf32> to vector<1x32xf32>
    %179 = vector.broadcast %178 : vector<1x32xf32> to vector<8x32xf32>
    %180 = arith.addf %177, %179 : vector<8x32xf32>
    %c0_67 = arith.constant 0 : index
    %c0_68 = arith.constant 0 : index
    %181 = vector.load %arg7[%c0_67, %c0_68] : memref<32x128xf32, #tpu.memory_space<vmem>>, vector<32x128xf32>
    %cst_69 = arith.constant dense<0.000000e+00> : vector<8x128xf32>
    %182 = tpu.matmul %180, %181, %cst_69 {dimension_numbers = #tpu.dot_dimension_numbers<[1], [0], [0], [1], [0, 0, 1, 1], [], []>} : vector<8x32xf32>, vector<32x128xf32>, vector<8x128xf32> -> vector<8x128xf32>
    %c0_70 = arith.constant 0 : index
    %c0_71 = arith.constant 0 : index
    %183 = vector.load %arg8[%c0_70, %c0_71] : memref<1x128xf32, #tpu.memory_space<vmem>>, vector<1x128xf32>
    %184 = vector.broadcast %183 : vector<1x128xf32> to vector<8x128xf32>
    %185 = arith.addf %182, %184 : vector<8x128xf32>
    %186 = arith.mulf %185, %185 : vector<8x128xf32>
    %187 = arith.mulf %185, %186 : vector<8x128xf32>
    %cst_72 = arith.constant 4.471500e-02 : f32
    %188 = vector.broadcast %cst_72 : f32 to vector<8x128xf32>
    %189 = arith.mulf %188, %187 : vector<8x128xf32>
    %190 = arith.addf %185, %189 : vector<8x128xf32>
    %cst_73 = arith.constant 0.797884583 : f32
    %191 = vector.broadcast %cst_73 : f32 to vector<8x128xf32>
    %192 = arith.mulf %191, %190 : vector<8x128xf32>
    %193 = math.tanh %192 : vector<8x128xf32>
    %cst_74 = arith.constant 1.000000e+00 : f32
    %194 = vector.broadcast %cst_74 : f32 to vector<8x128xf32>
    %195 = arith.addf %194, %193 : vector<8x128xf32>
    %cst_75 = arith.constant 5.000000e-01 : f32
    %196 = vector.broadcast %cst_75 : f32 to vector<8x128xf32>
    %197 = arith.mulf %196, %195 : vector<8x128xf32>
    %198 = arith.mulf %185, %197 : vector<8x128xf32>
    %c0_76 = arith.constant 0 : index
    %c0_77 = arith.constant 0 : index
    %199 = vector.load %arg9[%c0_76, %c0_77] : memref<128x32xf32, #tpu.memory_space<vmem>>, vector<128x32xf32>
    %cst_78 = arith.constant dense<0.000000e+00> : vector<8x32xf32>
    %200 = tpu.matmul %198, %199, %cst_78 {dimension_numbers = #tpu.dot_dimension_numbers<[1], [0], [0], [1], [0, 0, 1, 1], [], []>} : vector<8x128xf32>, vector<128x32xf32>, vector<8x32xf32> -> vector<8x32xf32>
    %201 = vector.extract_strided_slice %4 {offsets = [10, 0], sizes = [1, 32], strides = [1, 1]} : vector<12x32xf32> to vector<1x32xf32>
    %202 = vector.broadcast %201 : vector<1x32xf32> to vector<8x32xf32>
    %203 = arith.addf %200, %202 : vector<8x32xf32>
    %204 = vector.extract_strided_slice %4 {offsets = [11, 0], sizes = [1, 32], strides = [1, 1]} : vector<12x32xf32> to vector<1x32xf32>
    %205 = vector.broadcast %204 : vector<1x32xf32> to vector<8x32xf32>
    %206 = arith.mulf %205, %203 : vector<8x32xf32>
    %207 = arith.addf %180, %206 : vector<8x32xf32>
    %c0_79 = arith.constant 0 : index
    %c0_80 = arith.constant 0 : index
    %c0_81 = arith.constant 0 : index
    %208 = vector.load %arg11[%c0_79, %c0_80, %c0_81] : memref<1x8x32xf32, #tpu.memory_space<vmem>>, vector<1x8x32xf32>
    %209 = vector.shape_cast %208 : vector<1x8x32xf32> to vector<8x32xf32>
    %210 = vector.shape_cast %207 : vector<8x32xf32> to vector<1x8x32xf32>
    tpu.vector_store %arg11[%c0_79, %c0_80, %c0_81], %210 {strides = array<i32>} : memref<1x8x32xf32, #tpu.memory_space<vmem>>, vector<1x8x32xf32>,
    return
  }
  func.func @transform_0(%arg0: i32) -> (i32, i32, i32) {
    %c0_i32 = arith.constant 0 : i32
    %c0_i32_0 = arith.constant 0 : i32
    %c0_i32_1 = arith.constant 0 : i32
    return %arg0, %c0_i32, %c0_i32_0 : i32, i32, i32
  }
  func.func @transform_1(%arg0: i32) -> (i32, i32, i32) {
    %c0_i32 = arith.constant 0 : i32
    %c0_i32_0 = arith.constant 0 : i32
    %c0_i32_1 = arith.constant 0 : i32
    return %arg0, %c0_i32, %c0_i32_0 : i32, i32, i32
  }
  func.func @transform_2(%arg0: i32) -> (i32, i32) {
    %c0_i32 = arith.constant 0 : i32
    %c0_i32_0 = arith.constant 0 : i32
    %c0_i32_1 = arith.constant 0 : i32
    return %c0_i32, %c0_i32_0 : i32, i32
  }
  func.func @transform_3(%arg0: i32) -> (i32, i32) {
    %c0_i32 = arith.constant 0 : i32
    %c0_i32_0 = arith.constant 0 : i32
    %c0_i32_1 = arith.constant 0 : i32
    return %c0_i32, %c0_i32_0 : i32, i32
  }
  func.func @transform_4(%arg0: i32) -> (i32, i32) {
    %c0_i32 = arith.constant 0 : i32
    %c0_i32_0 = arith.constant 0 : i32
    %c0_i32_1 = arith.constant 0 : i32
    return %c0_i32, %c0_i32_0 : i32, i32
  }
  func.func @transform_5(%arg0: i32) -> (i32, i32) {
    %c0_i32 = arith.constant 0 : i32
    %c0_i32_0 = arith.constant 0 : i32
    %c0_i32_1 = arith.constant 0 : i32
    return %c0_i32, %c0_i32_0 : i32, i32
  }
  func.func @transform_6(%arg0: i32) -> (i32, i32) {
    %c0_i32 = arith.constant 0 : i32
    %c0_i32_0 = arith.constant 0 : i32
    %c0_i32_1 = arith.constant 0 : i32
    return %c0_i32, %c0_i32_0 : i32, i32
  }
  func.func @transform_7(%arg0: i32) -> (i32, i32) {
    %c0_i32 = arith.constant 0 : i32
    %c0_i32_0 = arith.constant 0 : i32
    %c0_i32_1 = arith.constant 0 : i32
    return %c0_i32, %c0_i32_0 : i32, i32
  }
  func.func @transform_8(%arg0: i32) -> (i32, i32) {
    %c0_i32 = arith.constant 0 : i32
    %c0_i32_0 = arith.constant 0 : i32
    %c0_i32_1 = arith.constant 0 : i32
    return %c0_i32, %c0_i32_0 : i32, i32
  }
  func.func @transform_9(%arg0: i32) -> (i32, i32) {
    %c0_i32 = arith.constant 0 : i32
    %c0_i32_0 = arith.constant 0 : i32
    %c0_i32_1 = arith.constant 0 : i32
    return %c0_i32, %c0_i32_0 : i32, i32
  }
  func.func @transform_10(%arg0: i32) -> (i32, i32, i32) {
    %c0_i32 = arith.constant 0 : i32
    %c0_i32_0 = arith.constant 0 : i32
    %c0_i32_1 = arith.constant 0 : i32
    return %arg0, %c0_i32, %c0_i32_0 : i32, i32, i32
  }
  func.func @transform_11(%arg0: i32) -> (i32, i32, i32, i32) {
    %c0_i32 = arith.constant 0 : i32
    %c0_i32_0 = arith.constant 0 : i32
    %c0_i32_1 = arith.constant 0 : i32
    %c0_i32_2 = arith.constant 0 : i32
    return %arg0, %c0_i32, %c0_i32_0, %c0_i32_1 : i32, i32, i32, i32
  }
}

</mosaic_0001>

<llo_original>
// kernel: regressor_block_forward.1
$region0: #{regressor_block_forward.1}
  #allocation0 [shape = 'u32[]', space=smem, size = 0x4, offset = 0x4, fixed_abs, tag = 'smem constant byte address 0x4 - core index']
  #allocation1 [shape = 'u32[72,128]{1,0:T(1,128)}', space=vmem, size = 0x9000, scoped, tag = 'internal scratch']
  %s0 = inlined_call_operand.vmem [shape: f32[2,8,32], index: 0, kind: input, shape index: {}]
  %s1 = inlined_call_operand.vmem [shape: f32[2,16,32], index: 1, kind: input, shape index: {}]
  %s2 = inlined_call_operand.vmem [shape: f32[32,32], index: 2, kind: input, shape index: {}]
  %s3 = inlined_call_operand.vmem [shape: f32[32,32], index: 3, kind: input, shape index: {}]
  %s4 = inlined_call_operand.vmem [shape: f32[32,32], index: 4, kind: input, shape index: {}]
  %s5 = inlined_call_operand.vmem [shape: f32[32,32], index: 5, kind: input, shape index: {}]
  %s6 = inlined_call_operand.vmem [shape: f32[32,128], index: 6, kind: input, shape index: {}]
  %s7 = inlined_call_operand.vmem [shape: f32[1,128], index: 7, kind: input, shape index: {}]
  %s8 = inlined_call_operand.vmem [shape: f32[128,32], index: 8, kind: input, shape index: {}]
  %s9 = inlined_call_operand.vmem [shape: f32[12,32], index: 9, kind: input, shape index: {}]
  %s10 = inlined_call_operand.hbm [shape: f32[2,8,32], index: 10, kind: output, shape index: {0}]
  %s11 = inlined_call_operand.hbm [shape: f32[2,4,8,16], index: 11, kind: output, shape index: {1}]
  %12 = xla_tuple %s10, %s11
  %s13 = sld [smem:[#allocation0]]
  $region81: #{regressor_block_forward.1} parent=0
    _
  %s15 = ssub.s32 1, %s13
  %s16 = scalar_select 0, %s15, %s13
  $region1: #{regressor_block_forward.1} parent=0
    #allocation2 [shape = 'u8[8192]{0}', space=vmem, size = 0x2000, scoped, tag = 'output window, operand 0']
    #allocation3 [shape = 's32[2]{0}', space=sflag, size = 0x8, scoped, tag = 'scoped memory for regressor_block_forward.1']
    #allocation4 [shape = 'u8[32768]{0}', space=vmem, size = 0x8000, scoped, tag = 'output window, operand 1']
    #allocation5 [shape = 's32[2]{0}', space=sflag, size = 0x8, scoped, tag = 'scoped memory for regressor_block_forward.1']
    %17 = vsyncpa [#allocation3], 0
    %s18 = scalar_lea.sflag [#allocation3], 1
    %19 = vsyncpa %s18, 0
    %20 = vsyncpa [#allocation5], 0
    %s21 = scalar_lea.sflag [#allocation5], 1
    %22 = vsyncpa %s21, 0
    loop: start=0, step=1, limit=4
    $region2: #{regressor_block_forward.1} parent=1 // loop_pre_header
      _
    $region3: #{regressor_block_forward.1} parent=1 // loop_header
      %s24 = sphi 0, %s28
      %p25 = scmp.ge.s32.totalorder %s24, 4
      %s34 = sphi 0, %s36
      %s37 = sphi 0, %s34
      %s38 = sphi 0, %s37
      %s54 = sphi 0, %s38
      %s60 = sphi 0, %s62
      %s63 = sphi 0, %s60
      %s64 = sphi 0, %s63
      %s80 = sphi 0, %s64
      %s84 = sphi 0, %s84
      %s86 = sphi 0, %s84
      %s87 = sphi 0, %s86
      %s101 = sphi 0, %s87
      %s105 = sphi 0, %s105
      %s107 = sphi 0, %s105
      %s108 = sphi 0, %s107
      %s122 = sphi 0, %s108
      %s126 = sphi 0, %s126
      %s128 = sphi 0, %s126
      %s129 = sphi 0, %s128
      %s143 = sphi 0, %s129
      %s147 = sphi 0, %s147
      %s149 = sphi 0, %s147
      %s150 = sphi 0, %s149
      %s164 = sphi 0, %s150
      %s168 = sphi 0, %s168
      %s170 = sphi 0, %s168
      %s171 = sphi 0, %s170
      %s185 = sphi 0, %s171
      %s189 = sphi 0, %s189
      %s191 = sphi 0, %s189
      %s192 = sphi 0, %s191
      %s206 = sphi 0, %s192
      %s210 = sphi 0, %s210
      %s212 = sphi 0, %s210
      %s213 = sphi 0, %s212
      %s227 = sphi 0, %s213
      %s231 = sphi 0, %s231
      %s233 = sphi 0, %s231
      %s234 = sphi 0, %s233
      %s248 = sphi 0, %s234
      %s254 = sphi 0, %s256
      %s257 = sphi 0, %s254
      %s258 = sphi 0, %s257
      %s274 = sphi 0, %s258
      %s280 = sphi 0, %s282
      %s283 = sphi 0, %s280
      %s284 = sphi 0, %s283
      %s300 = sphi 0, %s284
    $region4: #{regressor_block_forward.1} parent=1 // loop_header_branch
      %27 = sbr.rel (%p25) target = $region8
    $region5: #{regressor_block_forward.1} parent=1 // loop_body
      %s29 = ssub.s32 %s24, 1
      %s30 = ssub.s32 %s24, 2
      %s31 = sadd.s32 %s24, 1
      %s32 = ssub.s32 %s24, %s31
      %p33 = scmp.eq.s32.totalorder %s32, 0
      %s35 = sadd.s32 %s34, 1
      %s36 = scalar_select %p33, %s34, %s35
      %p39 = pneg %p33
      %p40 = scmp.eq.s32.totalorder %s24, 1
      %p41 = por %p39, %p40
      %p42 = scmp.ne.s32.totalorder %s34, %s37
      %p43 = scmp.eq.s32.totalorder %s24, 0
      %p44 = por %p42, %p43
      %p45 = scmp.ne.s32.totalorder %s34, %s37
      %p46 = scmp.eq.s32.totalorder %s29, 1
      %p47 = por %p45, %p46
      %p48 = scmp.ne.s32.totalorder %s37, %s38
      %p49 = scmp.eq.s32.totalorder %s29, 0
      %p50 = por %p48, %p49
      %p51 = scmp.ne.s32.totalorder %s37, %s38
      %p52 = scmp.eq.s32.totalorder %s30, 1
      %p53 = por %p51, %p52
      %p55 = scmp.ne.s32.totalorder %s38, %s54
      %p56 = scmp.eq.s32.totalorder %s30, 0
      %p57 = por %p55, %p56
      %s58 = ssub.s32 %s24, %s31
      %p59 = scmp.eq.s32.totalorder %s58, 0
      %s61 = sadd.s32 %s60, 1
      %s62 = scalar_select %p59, %s60, %s61
      %p65 = pneg %p59
      %p66 = scmp.eq.s32.totalorder %s24, 1
      %p67 = por %p65, %p66
      %p68 = scmp.ne.s32.totalorder %s60, %s63
      %p69 = scmp.eq.s32.totalorder %s24, 0
      %p70 = por %p68, %p69
      %p71 = scmp.ne.s32.totalorder %s60, %s63
      %p72 = scmp.eq.s32.totalorder %s29, 1
      %p73 = por %p71, %p72
      %p74 = scmp.ne.s32.totalorder %s63, %s64
      %p75 = scmp.eq.s32.totalorder %s29, 0
      %p76 = por %p74, %p75
      %p77 = scmp.ne.s32.totalorder %s63, %s64
      %p78 = scmp.eq.s32.totalorder %s30, 1
      %p79 = por %p77, %p78
      %p81 = scmp.ne.s32.totalorder %s64, %s80
      %p82 = scmp.eq.s32.totalorder %s30, 0
      %p83 = por %p81, %p82
      %s85 = sadd.s32 %s84, 1
      %p88 = scmp.eq.s32.totalorder %s24, 1
      %p89 = scmp.ne.s32.totalorder %s84, %s86
      %p90 = scmp.eq.s32.totalorder %s24, 0
      %p91 = por %p89, %p90
      %p92 = scmp.ne.s32.totalorder %s84, %s86
      %p93 = scmp.eq.s32.totalorder %s29, 1
      %p94 = por %p92, %p93
      %p95 = scmp.ne.s32.totalorder %s86, %s87
      %p96 = scmp.eq.s32.totalorder %s29, 0
      %p97 = por %p95, %p96
      %p98 = scmp.ne.s32.totalorder %s86, %s87
      %p99 = scmp.eq.s32.totalorder %s30, 1
      %p100 = por %p98, %p99
      %p102 = scmp.ne.s32.totalorder %s87, %s101
      %p103 = scmp.eq.s32.totalorder %s30, 0
      %p104 = por %p102, %p103
      %s106 = sadd.s32 %s105, 1
      %p109 = scmp.eq.s32.totalorder %s24, 1
      %p110 = scmp.ne.s32.totalorder %s105, %s107
      %p111 = scmp.eq.s32.totalorder %s24, 0
      %p112 = por %p110, %p111
      %p113 = scmp.ne.s32.totalorder %s105, %s107
      %p114 = scmp.eq.s32.totalorder %s29, 1
      %p115 = por %p113, %p114
      %p116 = scmp.ne.s32.totalorder %s107, %s108
      %p117 = scmp.eq.s32.totalorder %s29, 0
      %p118 = por %p116, %p117
      %p119 = scmp.ne.s32.totalorder %s107, %s108
      %p120 = scmp.eq.s32.totalorder %s30, 1
      %p121 = por %p119, %p120
      %p123 = scmp.ne.s32.totalorder %s108, %s122
      %p124 = scmp.eq.s32.totalorder %s30, 0
      %p125 = por %p123, %p124
      %s127 = sadd.s32 %s126, 1
      %p130 = scmp.eq.s32.totalorder %s24, 1
      %p131 = scmp.ne.s32.totalorder %s126, %s128
      %p132 = scmp.eq.s32.totalorder %s24, 0
      %p133 = por %p131, %p132
      %p134 = scmp.ne.s32.totalorder %s126, %s128
      %p135 = scmp.eq.s32.totalorder %s29, 1
      %p136 = por %p134, %p135
      %p137 = scmp.ne.s32.totalorder %s128, %s129
      %p138 = scmp.eq.s32.totalorder %s29, 0
      %p139 = por %p137, %p138
      %p140 = scmp.ne.s32.totalorder %s128, %s129
      %p141 = scmp.eq.s32.totalorder %s30, 1
      %p142 = por %p140, %p141
      %p144 = scmp.ne.s32.totalorder %s129, %s143
      %p145 = scmp.eq.s32.totalorder %s30, 0
      %p146 = por %p144, %p145
      %s148 = sadd.s32 %s147, 1
      %p151 = scmp.eq.s32.totalorder %s24, 1
      %p152 = scmp.ne.s32.totalorder %s147, %s149
      %p153 = scmp.eq.s32.totalorder %s24, 0
      %p154 = por %p152, %p153
      %p155 = scmp.ne.s32.totalorder %s147, %s149
      %p156 = scmp.eq.s32.totalorder %s29, 1
      %p157 = por %p155, %p156
      %p158 = scmp.ne.s32.totalorder %s149, %s150
      %p159 = scmp.eq.s32.totalorder %s29, 0
      %p160 = por %p158, %p159
      %p161 = scmp.ne.s32.totalorder %s149, %s150
      %p162 = scmp.eq.s32.totalorder %s30, 1
      %p163 = por %p161, %p162
      %p165 = scmp.ne.s32.totalorder %s150, %s164
      %p166 = scmp.eq.s32.totalorder %s30, 0
      %p167 = por %p165, %p166
      %s169 = sadd.s32 %s168, 1
      %p172 = scmp.eq.s32.totalorder %s24, 1
      %p173 = scmp.ne.s32.totalorder %s168, %s170
      %p174 = scmp.eq.s32.totalorder %s24, 0
      %p175 = por %p173, %p174
      %p176 = scmp.ne.s32.totalorder %s168, %s170
      %p177 = scmp.eq.s32.totalorder %s29, 1
      %p178 = por %p176, %p177
      %p179 = scmp.ne.s32.totalorder %s170, %s171
      %p180 = scmp.eq.s32.totalorder %s29, 0
      %p181 = por %p179, %p180
      %p182 = scmp.ne.s32.totalorder %s170, %s171
      %p183 = scmp.eq.s32.totalorder %s30, 1
      %p184 = por %p182, %p183
      %p186 = scmp.ne.s32.totalorder %s171, %s185
      %p187 = scmp.eq.s32.totalorder %s30, 0
      %p188 = por %p186, %p187
      %s190 = sadd.s32 %s189, 1
      %p193 = scmp.eq.s32.totalorder %s24, 1
      %p194 = scmp.ne.s32.totalorder %s189, %s191
      %p195 = scmp.eq.s32.totalorder %s24, 0
      %p196 = por %p194, %p195
      %p197 = scmp.ne.s32.totalorder %s189, %s191
      %p198 = scmp.eq.s32.totalorder %s29, 1
      %p199 = por %p197, %p198
      %p200 = scmp.ne.s32.totalorder %s191, %s192
      %p201 = scmp.eq.s32.totalorder %s29, 0
      %p202 = por %p200, %p201
      %p203 = scmp.ne.s32.totalorder %s191, %s192
      %p204 = scmp.eq.s32.totalorder %s30, 1
      %p205 = por %p203, %p204
      %p207 = scmp.ne.s32.totalorder %s192, %s206
      %p208 = scmp.eq.s32.totalorder %s30, 0
      %p209 = por %p207, %p208
      %s211 = sadd.s32 %s210, 1
      %p214 = scmp.eq.s32.totalorder %s24, 1
      %p215 = scmp.ne.s32.totalorder %s210, %s212
      %p216 = scmp.eq.s32.totalorder %s24, 0
      %p217 = por %p215, %p216
      %p218 = scmp.ne.s32.totalorder %s210, %s212
      %p219 = scmp.eq.s32.totalorder %s29, 1
      %p220 = por %p218, %p219
      %p221 = scmp.ne.s32.totalorder %s212, %s213
      %p222 = scmp.eq.s32.totalorder %s29, 0
      %p223 = por %p221, %p222
      %p224 = scmp.ne.s32.totalorder %s212, %s213
      %p225 = scmp.eq.s32.totalorder %s30, 1
      %p226 = por %p224, %p225
      %p228 = scmp.ne.s32.totalorder %s213, %s227
      %p229 = scmp.eq.s32.totalorder %s30, 0
      %p230 = por %p228, %p229
      %s232 = sadd.s32 %s231, 1
      %p235 = scmp.eq.s32.totalorder %s24, 1
      %p236 = scmp.ne.s32.totalorder %s231, %s233
      %p237 = scmp.eq.s32.totalorder %s24, 0
      %p238 = por %p236, %p237
      %p239 = scmp.ne.s32.totalorder %s231, %s233
      %p240 = scmp.eq.s32.totalorder %s29, 1
      %p241 = por %p239, %p240
      %p242 = scmp.ne.s32.totalorder %s233, %s234
      %p243 = scmp.eq.s32.totalorder %s29, 0
      %p244 = por %p242, %p243
      %p245 = scmp.ne.s32.totalorder %s233, %s234
      %p246 = scmp.eq.s32.totalorder %s30, 1
      %p247 = por %p245, %p246
      %p249 = scmp.ne.s32.totalorder %s234, %s248
      %p250 = scmp.eq.s32.totalorder %s30, 0
      %p251 = por %p249, %p250
      %s252 = ssub.s32 %s24, %s31
      %p253 = scmp.eq.s32.totalorder %s252, 0
      %s255 = sadd.s32 %s254, 1
      %s256 = scalar_select %p253, %s254, %s255
      %p259 = pneg %p253
      %p260 = scmp.eq.s32.totalorder %s24, 1
      %p261 = por %p259, %p260
      %p262 = scmp.ne.s32.totalorder %s254, %s257
      %p263 = scmp.eq.s32.totalorder %s24, 0
      %p264 = por %p262, %p263
      %p265 = scmp.ne.s32.totalorder %s254, %s257
      %p266 = scmp.eq.s32.totalorder %s29, 1
      %p267 = por %p265, %p266
      %p268 = scmp.ne.s32.totalorder %s257, %s258
      %p269 = scmp.eq.s32.totalorder %s29, 0
      %p270 = por %p268, %p269
      %p271 = scmp.ne.s32.totalorder %s257, %s258
      %p272 = scmp.eq.s32.totalorder %s30, 1
      %p273 = por %p271, %p272
      %p275 = scmp.ne.s32.totalorder %s258, %s274
      %p276 = scmp.eq.s32.totalorder %s30, 0
      %p277 = por %p275, %p276
      %s278 = ssub.s32 %s24, %s31
      %p279 = scmp.eq.s32.totalorder %s278, 0
      %s281 = sadd.s32 %s280, 1
      %s282 = scalar_select %p279, %s280, %s281
      %p285 = pneg %p279
      %p286 = scmp.eq.s32.totalorder %s24, 1
      %p287 = por %p285, %p286
      %p288 = scmp.ne.s32.totalorder %s280, %s283
      %p289 = scmp.eq.s32.totalorder %s24, 0
      %p290 = por %p288, %p289
      %p291 = scmp.ne.s32.totalorder %s280, %s283
      %p292 = scmp.eq.s32.totalorder %s29, 1
      %p293 = por %p291, %p292
      %p294 = scmp.ne.s32.totalorder %s283, %s284
      %p295 = scmp.eq.s32.totalorder %s29, 0
      %p296 = por %p294, %p295
      %p297 = scmp.ne.s32.totalorder %s283, %s284
      %p298 = scmp.eq.s32.totalorder %s30, 1
      %p299 = por %p297, %p298
      %p301 = scmp.ne.s32.totalorder %s284, %s300
      %p302 = scmp.eq.s32.totalorder %s30, 0
      %p303 = por %p301, %p302
      %p304 = scmp.le.s32.totalorder 1, %s24
      %p305 = scmp.lt.s32.totalorder %s24, 3
      %p306 = pnand %p304, %p305
      %p307 = pneg %p306
      // Predicated region
      $region9: #{regressor_block_forward.1} parent=5 // pred_check
        _
      $region10: #{regressor_block_forward.1} parent=5 // pred_check_branch
        %309 = sbr.rel (%p306) target = $region12
      $region11: #{regressor_block_forward.1} parent=5 // pred_region
        %s310 = ssub.s32 %s24, 1
        // Predicated region
        $region13: #{regressor_block_forward.1} parent=11 // pred_check
          %p311 = pneg %p97
        $region14: #{regressor_block_forward.1} parent=11 // pred_check_branch
          %313 = sbr.rel (%p311) target = $region16
        $region15: #{regressor_block_forward.1} parent=11 // pred_region
          _
        $region16: #{regressor_block_forward.1} parent=11 // pred_fallthru
          _
        // Predicated region
        $region17: #{regressor_block_forward.1} parent=11 // pred_check
          %p314 = pneg %p118
        $region18: #{regressor_block_forward.1} parent=11 // pred_check_branch
          %316 = sbr.rel (%p314) target = $region20
        $region19: #{regressor_block_forward.1} parent=11 // pred_region
          _
        $region20: #{regressor_block_forward.1} parent=11 // pred_fallthru
          _
        // Predicated region
        $region21: #{regressor_block_forward.1} parent=11 // pred_check
          %p317 = pneg %p139
        $region22: #{regressor_block_forward.1} parent=11 // pred_check_branch
          %319 = sbr.rel (%p317) target = $region24
        $region23: #{regressor_block_forward.1} parent=11 // pred_region
          _
        $region24: #{regressor_block_forward.1} parent=11 // pred_fallthru
          _
        // Predicated region
        $region25: #{regressor_block_forward.1} parent=11 // pred_check
          %p320 = pneg %p160
        $region26: #{regressor_block_forward.1} parent=11 // pred_check_branch
          %322 = sbr.rel (%p320) target = $region28
        $region27: #{regressor_block_forward.1} parent=11 // pred_region
          _
        $region28: #{regressor_block_forward.1} parent=11 // pred_fallthru
          _
        // Predicated region
        $region29: #{regressor_block_forward.1} parent=11 // pred_check
          %p323 = pneg %p181
        $region30: #{regressor_block_forward.1} parent=11 // pred_check_branch
          %325 = sbr.rel (%p323) target = $region32
        $region31: #{regressor_block_forward.1} parent=11 // pred_region
          _
        $region32: #{regressor_block_forward.1} parent=11 // pred_fallthru
          _
        // Predicated region
        $region33: #{regressor_block_forward.1} parent=11 // pred_check
          %p326 = pneg %p202
        $region34: #{regressor_block_forward.1} parent=11 // pred_check_branch
          %328 = sbr.rel (%p326) target = $region36
        $region35: #{regressor_block_forward.1} parent=11 // pred_region
          _
        $region36: #{regressor_block_forward.1} parent=11 // pred_fallthru
          _
        // Predicated region
        $region37: #{regressor_block_forward.1} parent=11 // pred_check
          %p329 = pneg %p223
        $region38: #{regressor_block_forward.1} parent=11 // pred_check_branch
          %331 = sbr.rel (%p329) target = $region40
        $region39: #{regressor_block_forward.1} parent=11 // pred_region
          _
        $region40: #{regressor_block_forward.1} parent=11 // pred_fallthru
          _
        // Predicated region
        $region41: #{regressor_block_forward.1} parent=11 // pred_check
          %p332 = pneg %p244
        $region42: #{regressor_block_forward.1} parent=11 // pred_check_branch
          %334 = sbr.rel (%p332) target = $region44
        $region43: #{regressor_block_forward.1} parent=11 // pred_region
          _
        $region44: #{regressor_block_forward.1} parent=11 // pred_fallthru
          _
      $region12: #{regressor_block_forward.1} parent=5 // pred_fallthru
        _
      %p335 = scmp.lt.s32.totalorder %s24, 2
      // Predicated region
      $region45: #{regressor_block_forward.1} parent=5 // pred_check
        %p336 = pneg %p335
      $region46: #{regressor_block_forward.1} parent=5 // pred_check_branch
        %338 = sbr.rel (%p336) target = $region48
      $region47: #{regressor_block_forward.1} parent=5 // pred_region
        // Predicated region
        $region49: #{regressor_block_forward.1} parent=47 // pred_check
          %p339 = pneg %p44
        $region50: #{regressor_block_forward.1} parent=47 // pred_check_branch
          %341 = sbr.rel (%p339) target = $region52
        $region51: #{regressor_block_forward.1} parent=47 // pred_region
          %p342 = scmp.lt.s32.totalorder %s24, 1
          %s343 = scalar_select %p342, %s24, 1
          %s344 = smul.addr %s343, 8
          %s345 = scalar_lea.vmem %s0, %s344
        $region52: #{regressor_block_forward.1} parent=47 // pred_fallthru
          _
        // Predicated region
        $region53: #{regressor_block_forward.1} parent=47 // pred_check
          %p346 = pneg %p70
        $region54: #{regressor_block_forward.1} parent=47 // pred_check_branch
          %348 = sbr.rel (%p346) target = $region56
        $region55: #{regressor_block_forward.1} parent=47 // pred_region
          %p349 = scmp.lt.s32.totalorder %s24, 1
          %s350 = scalar_select %p349, %s24, 1
          %s351 = smul.addr %s350, 2
          %s352 = smul.addr %s351, 8
          %s353 = scalar_lea.vmem %s1, %s352
        $region56: #{regressor_block_forward.1} parent=47 // pred_fallthru
          _
      $region48: #{regressor_block_forward.1} parent=5 // pred_fallthru
        _
      %p354 = scmp.le.s32.totalorder 1, %s24
      %p355 = scmp.lt.s32.totalorder %s24, 3
      %p356 = pnand %p354, %p355
      %p357 = pneg %p356
      // Predicated region
      $region57: #{regressor_block_forward.1} parent=5 // pred_check
        _
      $region58: #{regressor_block_forward.1} parent=5 // pred_check_branch
        %359 = sbr.rel (%p356) target = $region60
      $region59: #{regressor_block_forward.1} parent=5 // pred_region
        %s360 = ssub.s32 %s24, 1
        %p361 = scmp.lt.s32.totalorder %s29, 1
        %s362 = scalar_select %p361, %s29, 1
        %s363 = smul.addr %s362, 8
        %s364 = scalar_lea.vmem %s0, %s363
        %p365 = pneg %p50
        %p366 = pneg %p47
        %p367 = scmp.lt.s32.totalorder %s29, 1
        %s368 = scalar_select %p367, %s29, 1
        %s369 = smul.addr %s368, 2
        %s370 = smul.addr %s369, 8
        %s371 = scalar_lea.vmem %s1, %s370
        %p372 = pneg %p76
        %p373 = pneg %p73
        %p374 = pneg %p97
        %p375 = pneg %p94
        %p376 = pneg %p118
        %p377 = pneg %p115
        %p378 = pneg %p139
        %p379 = pneg %p136
        %p380 = pneg %p160
        %p381 = pneg %p157
        %p382 = pneg %p181
        %p383 = pneg %p178
        %p384 = pneg %p202
        %p385 = pneg %p199
        %p386 = pneg %p223
        %p387 = pneg %p220
        %p388 = pneg %p244
        %p389 = pneg %p241
        %p390 = pneg %p270
        %p391 = pneg %p267
        %s392 = sand.u32 %s257, 1
        %s393 = scalar_lea.sflag [#allocation3], %s392
        %s394 = sand.u32 %s257, 1
        %s395 = smul.addr %s394, 8
        %s396 = scalar_lea.vmem [#allocation2], %s395
        %p397 = pneg %p296
        %p398 = pneg %p293
        %s399 = sand.u32 %s283, 1
        %s400 = scalar_lea.sflag [#allocation5], %s399
        %s401 = sand.u32 %s283, 1
        %s402 = smul.addr %s401, 32
        %s403 = scalar_lea.vmem [#allocation4], %s402
        %p404 = scmp.lt.s32.totalorder %s29, 1
        %s405 = scalar_select %p404, %s29, 1
        %s406 = smul.addr %s405, 8
        %s407 = scalar_lea.vmem %s0, %s406
        %p408 = scmp.lt.s32.totalorder %s29, 1
        %s409 = scalar_select %p408, %s29, 1
        %s410 = smul.addr %s409, 2
        %s411 = smul.addr %s410, 8
        %s412 = scalar_lea.vmem %s1, %s411
        %v413 = vld [vmem:[%s407] sm:$0xff]
        %v414 = vld [vmem:[%s412] sm:$0xff]
        %v415 = vld [vmem:[%s412 + $0x8] sm:$0xff]
        %v416 = vld [vmem:[%s9] sm:$0xff]
        %v417 = vld [vmem:[%s9 + $0x8] sm:$0xf]
        %vm418 = vcmask 261120
        %v419 = vsel %vm418, %v413, 0.0
        %420 = vadd.xlane.f32.xlu0 %v419
        %v421 = vpop.xlane.xlu0 %420
        %v422 = vrcp.pop 32.0
        %v423 = vmul.f32 32.0, %v422
        %v424 = vsub.f32 1.0, %v423
        %v425 = vmul.f32 %v422, %v424
        %v426 = vadd.f32 %v422, %v425
        %vm427 = vweird.f32 %v422
        %v428 = vsel %vm427, %v422, %v426
        %v429 = vmul.f32 %v421, %v428
        %v430 = vsub.f32 %v413, %v429
        %v431 = vmul.f32 %v430, %v430
        %v432 = vsel %vm418, %v431, 0.0
        %433 = vadd.xlane.f32.xlu0 %v432
        %v434 = vpop.xlane.xlu0 %433
        %v435 = vmul.f32 %v434, %v428
        %v436 = vadd.f32 %v435, 1e-05
        %v437 = vrsqrt.pop %v436
        %v438 = vmul.f32 %v437, %v436
        %v439 = vmul.f32 %v438, %v437
        %v440 = vmul.f32 0.5, %v439
        %v441 = vsub.f32 1.5, %v440
        %v442 = vmul.f32 %v437, %v441
        %vm443 = vweird.f32 %v436
        %vm444 = vweird.f32 %v437
        %vm445 = vmor %vm443, %vm444
        %v446 = vsel %vm445, %v437, %v442
        %v447 = vmul.f32 %v430, %v446
        %v448 = vperm.slane %v416, 0
        %v449 = vmul.f32 %v447, %v448
        %v450 = vperm.slane %v416, 1
        %v451 = vadd.f32 %v449, %v450
        %v452 = vsel %vm418, %v414, 0.0
        %453 = vadd.xlane.f32.xlu0 %v452
        %v454 = vpop.xlane.xlu0 %453
        %v455 = vsel %vm418, %v415, 0.0
        %456 = vadd.xlane.f32.xlu0 %v455
        %v457 = vpop.xlane.xlu0 %456
        %v458 = vmul.f32 %v454, %v428
        %v459 = vmul.f32 %v457, %v428
        %v460 = vsub.f32 %v414, %v458
        %v461 = vsub.f32 %v415, %v459
        %v462 = vmul.f32 %v460, %v460
        %v463 = vmul.f32 %v461, %v461
        %v464 = vsel %vm418, %v462, 0.0
        %465 = vadd.xlane.f32.xlu0 %v464
        %v466 = vpop.xlane.xlu0 %465
        %v467 = vsel %vm418, %v463, 0.0
        %468 = vadd.xlane.f32.xlu0 %v467
        %v469 = vpop.xlane.xlu0 %468
        %v470 = vmul.f32 %v466, %v428
        %v471 = vmul.f32 %v469, %v428
        %v472 = vadd.f32 %v470, 1e-05
        %v473 = vadd.f32 %v471, 1e-05
        %v474 = vrsqrt.pop %v472
        %v475 = vmul.f32 %v474, %v472
        %v476 = vmul.f32 %v475, %v474
        %v477 = vmul.f32 0.5, %v476
        %v478 = vsub.f32 1.5, %v477
        %v479 = vmul.f32 %v474, %v478
        %vm480 = vweird.f32 %v472
        %vm481 = vweird.f32 %v474
        %vm482 = vmor %vm480, %vm481
        %v483 = vsel %vm482, %v474, %v479
        %v484 = vrsqrt.pop %v473
        %v485 = vmul.f32 %v484, %v473
        %v486 = vmul.f32 %v485, %v484
        %v487 = vmul.f32 0.5, %v486
        %v488 = vsub.f32 1.5, %v487
        %v489 = vmul.f32 %v484, %v488
        %vm490 = vweird.f32 %v473
        %vm491 = vweird.f32 %v484
        %vm492 = vmor %vm490, %vm491
        %v493 = vsel %vm492, %v484, %v489
        %v494 = vmul.f32 %v460, %v483
        %v495 = vmul.f32 %v461, %v493
        %v496 = vperm.slane %v416, 2
        %v497 = vmul.f32 %v494, %v496
        %v498 = vmul.f32 %v495, %v496
        %v499 = vperm.slane %v416, 3
        %v500 = vadd.f32 %v497, %v499
        %v501 = vadd.f32 %v498, %v499
        %v502 = vperm.slane %v416, 4
        %v503 = vmul.f32 %v494, %v502
        %v504 = vmul.f32 %v495, %v502
        %v505 = vperm.slane %v416, 5
        %v506 = vadd.f32 %v503, %v505
        %v507 = vadd.f32 %v504, %v505
        %v508 = vld [vmem:[%s2] sm:$0xff]
        %v509 = vld [vmem:[%s2 + $0x8] sm:$0xff]
        %v510 = vld [vmem:[%s2 + $0x10] sm:$0xff]
        %v511 = vld [vmem:[%s2 + $0x18] sm:$0xff]
        %v513 = vsel %vm418, %v451, 0
        %515 = vmatpush.msra.mxu0 0.0
        %516 = vmatpush.msra.mxu0 0.0
        %517 = vmatpush.msra.mxu0 0.0
        %518 = vmatpush.msra.mxu0 0.0
        %519 = vmatpush.msra.mxu0 0.0
        %520 = vmatpush.msra.mxu0 0.0
        %521 = vmatpush.msra.mxu0 0.0
        %522 = vmatpush.msra.mxu0 0.0
        %523 = vmatpush.msra.mxu0 0.0
        %524 = vmatpush.msra.mxu0 0.0
        %525 = vmatpush.msra.mxu0 0.0
        %526 = vmatpush.msra.mxu0 0.0
        %527 = vmatpush.msra.mxu0 %v511
        %528 = vmatpush.msra.mxu0 %v510
        %529 = vmatpush.msra.mxu0 %v509
        %530 = vmatpush.msra.mxu0 %v508
        %531 = vmatmul.f32.gmra.mxu0 %v513
        %v532 = vpop.f32.mrf.mxu0
        %v533 = vadd.f32 0.0, %v532
        %534 = vdwg.mxu0
        %v535 = vld [vmem:[%s3] sm:$0xff]
        %v536 = vld [vmem:[%s3 + $0x8] sm:$0xff]
        %v537 = vld [vmem:[%s3 + $0x10] sm:$0xff]
        %v538 = vld [vmem:[%s3 + $0x18] sm:$0xff]
        %v540 = vsel %vm418, %v500, 0
        %v543 = vsel %vm418, %v501, 0
        %545 = vmatpush.msra.mxu0 0.0
        %546 = vmatpush.msra.mxu0 0.0
        %547 = vmatpush.msra.mxu0 0.0
        %548 = vmatpush.msra.mxu0 0.0
        %549 = vmatpush.msra.mxu0 0.0
        %550 = vmatpush.msra.mxu0 0.0
        %551 = vmatpush.msra.mxu0 0.0
        %552 = vmatpush.msra.mxu0 0.0
        %553 = vmatpush.msra.mxu0 0.0
        %554 = vmatpush.msra.mxu0 0.0
        %555 = vmatpush.msra.mxu0 0.0
        %556 = vmatpush.msra.mxu0 0.0
        %557 = vmatpush.msra.mxu0 %v538
        %558 = vmatpush.msra.mxu0 %v537
        %559 = vmatpush.msra.mxu0 %v536
        %560 = vmatpush.msra.mxu0 %v535
        %561 = vmatmul.f32.gmra.mxu0 %v540
        %v562 = vpop.f32.mrf.mxu0
        %v563 = vadd.f32 0.0, %v562
        %564 = vmatmul.f32.gmra.mxu0 %v543
        %v565 = vpop.f32.mrf.mxu0
        %v566 = vadd.f32 0.0, %v565
        %567 = vdwg.mxu0
        %v568 = vld [vmem:[%s4] sm:$0xff]
        %v569 = vld [vmem:[%s4 + $0x8] sm:$0xff]
        %v570 = vld [vmem:[%s4 + $0x10] sm:$0xff]
        %v571 = vld [vmem:[%s4 + $0x18] sm:$0xff]
        %v573 = vsel %vm418, %v506, 0
        %v576 = vsel %vm418, %v507, 0
        %578 = vmatpush.msra.mxu0 0.0
        %579 = vmatpush.msra.mxu0 0.0
        %580 = vmatpush.msra.mxu0 0.0
        %581 = vmatpush.msra.mxu0 0.0
        %582 = vmatpush.msra.mxu0 0.0
        %583 = vmatpush.msra.mxu0 0.0
        %584 = vmatpush.msra.mxu0 0.0
        %585 = vmatpush.msra.mxu0 0.0
        %586 = vmatpush.msra.mxu0 0.0
        %587 = vmatpush.msra.mxu0 0.0
        %588 = vmatpush.msra.mxu0 0.0
        %589 = vmatpush.msra.mxu0 0.0
        %590 = vmatpush.msra.mxu0 %v571
        %591 = vmatpush.msra.mxu0 %v570
        %592 = vmatpush.msra.mxu0 %v569
        %593 = vmatpush.msra.mxu0 %v568
        %594 = vmatmul.f32.gmra.mxu0 %v573
        %v595 = vpop.f32.mrf.mxu0
        %v596 = vadd.f32 0.0, %v595
        %597 = vmatmul.f32.gmra.mxu0 %v576
        %v598 = vpop.f32.mrf.mxu0
        %v599 = vadd.f32 0.0, %v598
        %600 = vdwg.mxu0
        %vm601 = vcmask 64512
        %v603 = vsel %vm601, %v533, 0
        %v606 = vsel %vm601, %v563, 0
        %v609 = vsel %vm601, %v566, 0
        %611 = vmatpush.xpose.msra.mxu0 0.0
        %612 = vmatpush.xpose.msra.mxu0 0.0
        %613 = vmatpush.xpose.msra.mxu0 0.0
        %614 = vmatpush.xpose.msra.mxu0 0.0
        %615 = vmatpush.xpose.msra.mxu0 0.0
        %616 = vmatpush.xpose.msra.mxu0 0.0
        %617 = vmatpush.xpose.msra.mxu0 0.0
        %618 = vmatpush.xpose.msra.mxu0 0.0
        %619 = vmatpush.xpose.msra.mxu0 0.0
        %620 = vmatpush.xpose.msra.mxu0 0.0
        %621 = vmatpush.xpose.msra.mxu0 0.0
        %622 = vmatpush.xpose.msra.mxu0 0.0
        %623 = vmatpush.xpose.msra.mxu0 0.0
        %624 = vmatpush.xpose.msra.mxu0 0.0
        %625 = vmatpush.xpose.msra.mxu0 %v609
        %626 = vmatpush.xpose.msra.mxu0 %v606
        %627 = vmatmul.f32.gmra.mxu0 %v603
        %v628 = vpop.f32.mrf.mxu0
        %v629 = vadd.f32 0.0, %v628
        %630 = vdwg.mxu0
        %vm631 = vcmask 130048
        %v632 = vsel %vm631, %v629, -inf
        %633 = vmax.xlane.f32.xlu0 %v632
        %v634 = vpop.xlane.xlu0 %633
        %v635 = vsub.f32 %v629, %v634
        %v636 = vmul.f32 %v635, 1.442695
        %v637 = vpow.pop %v636
        %v638 = vsel %vm631, %v637, 0.0
        %639 = vadd.xlane.f32.xlu0 %v638
        %v640 = vpop.xlane.xlu0 %639
        %v641 = vrcp.pop %v640
        %v642 = vmul.f32 %v640, %v641
        %v643 = vsub.f32 1.0, %v642
        %v644 = vmul.f32 %v641, %v643
        %v645 = vadd.f32 %v641, %v644
        %vm646 = vweird.f32 %v640
        %vm647 = vweird.f32 %v641
        %vm648 = vmor %vm646, %vm647
        %v649 = vsel %vm648, %v641, %v645
        %v650 = vand.u32 2147483647, %v640
        %vm651 = vcmp.eq.f32.partialorder %v650, 8.507059e+37
        %v652 = vand.u32 %v640, 2147483648
        %v653 = vor.u32 1.1754944e-38, %v652
        %v654 = vsel %vm651, %v653, %v649
        %v655 = vmul.f32 %v637, %v654
        %656 = vst.msk [vmem:[%s403] sm:$0xff] %vm631, %v655
        %v658 = vsel %vm631, %v655, 0
        %660 = vmatpush.msra.mxu0 0.0
        %661 = vmatpush.msra.mxu0 0.0
        %662 = vmatpush.msra.mxu0 0.0
        %663 = vmatpush.msra.mxu0 0.0
        %664 = vmatpush.msra.mxu0 0.0
        %665 = vmatpush.msra.mxu0 0.0
        %666 = vmatpush.msra.mxu0 0.0
        %667 = vmatpush.msra.mxu0 0.0
        %668 = vmatpush.msra.mxu0 0.0
        %669 = vmatpush.msra.mxu0 0.0
        %670 = vmatpush.msra.mxu0 0.0
        %671 = vmatpush.msra.mxu0 0.0
        %672 = vmatpush.msra.mxu0 0.0
        %673 = vmatpush.msra.mxu0 0.0
        %674 = vmatpush.msra.mxu0 %v599
        %675 = vmatpush.msra.mxu0 %v596
        %676 = vmatmul.f32.gmra.mxu0 %v658
        %v677 = vpop.f32.mrf.mxu0
        %v678 = vadd.f32 0.0, %v677
        %679 = vdwg.mxu0
        %680 = vrot.lane.b32.xlu0 %v533, 120
        %v681 = vpop.permute.xlu0 %680
        %682 = vrot.lane.b32.xlu0 %v563, 120
        %v683 = vpop.permute.xlu0 %682
        %684 = vrot.lane.b32.xlu0 %v566, 120
        %v685 = vpop.permute.xlu0 %684
        %v686 = vsel %vm601, %v681, 0
        %v688 = vsel %vm601, %v683, 0
        %v690 = vsel %vm601, %v685, 0
        %692 = vmatpush.xpose.msra.mxu0 0.0
        %693 = vmatpush.xpose.msra.mxu0 0.0
        %694 = vmatpush.xpose.msra.mxu0 0.0
        %695 = vmatpush.xpose.msra.mxu0 0.0
        %696 = vmatpush.xpose.msra.mxu0 0.0
        %697 = vmatpush.xpose.msra.mxu0 0.0
        %698 = vmatpush.xpose.msra.mxu0 0.0
        %699 = vmatpush.xpose.msra.mxu0 0.0
        %700 = vmatpush.xpose.msra.mxu0 0.0
        %701 = vmatpush.xpose.msra.mxu0 0.0
        %702 = vmatpush.xpose.msra.mxu0 0.0
        %703 = vmatpush.xpose.msra.mxu0 0.0
        %704 = vmatpush.xpose.msra.mxu0 0.0
        %705 = vmatpush.xpose.msra.mxu0 0.0
        %706 = vmatpush.xpose.msra.mxu0 %v690
        %707 = vmatpush.xpose.msra.mxu0 %v688
        %708 = vmatmul.f32.gmra.mxu0 %v686
        %v709 = vpop.f32.mrf.mxu0
        %v710 = vadd.f32 0.0, %v709
        %711 = vdwg.mxu0
        %v712 = vsel %vm631, %v710, -inf
        %713 = vmax.xlane.f32.xlu0 %v712
        %v714 = vpop.xlane.xlu0 %713
        %v715 = vsub.f32 %v710, %v714
        %v716 = vmul.f32 %v715, 1.442695
        %v717 = vpow.pop %v716
        %v718 = vsel %vm631, %v717, 0.0
        %719 = vadd.xlane.f32.xlu0 %v718
        %v720 = vpop.xlane.xlu0 %719
        %v721 = vrcp.pop %v720
        %v722 = vmul.f32 %v720, %v721
        %v723 = vsub.f32 1.0, %v722
        %v724 = vmul.f32 %v721, %v723
        %v725 = vadd.f32 %v721, %v724
        %vm726 = vweird.f32 %v720
        %vm727 = vweird.f32 %v721
        %vm728 = vmor %vm726, %vm727
        %v729 = vsel %vm728, %v721, %v725
        %v730 = vand.u32 2147483647, %v720
        %vm731 = vcmp.eq.f32.partialorder %v730, 8.507059e+37
        %v732 = vand.u32 %v720, 2147483648
        %v733 = vor.u32 1.1754944e-38, %v732
        %v734 = vsel %vm731, %v733, %v729
        %v735 = vmul.f32 %v717, %v734
        %s736 = scalar_lea.vmem %s403, 8 [#allocation4]
        %737 = vst.msk [vmem:[%s736] sm:$0xff] %vm631, %v735
        %740 = vrot.lane.b32.xlu0 %v596, 120
        %v741 = vpop.permute.xlu0 %740
        %742 = vrot.lane.b32.xlu0 %v599, 120
        %v743 = vpop.permute.xlu0 %742
        %v747 = vsel %vm631, %v735, 0
        %749 = vmatpush.msra.mxu0 0.0
        %750 = vmatpush.msra.mxu0 0.0
        %751 = vmatpush.msra.mxu0 0.0
        %752 = vmatpush.msra.mxu0 0.0
        %753 = vmatpush.msra.mxu0 0.0
        %754 = vmatpush.msra.mxu0 0.0
        %755 = vmatpush.msra.mxu0 0.0
        %756 = vmatpush.msra.mxu0 0.0
        %757 = vmatpush.msra.mxu0 0.0
        %758 = vmatpush.msra.mxu0 0.0
        %759 = vmatpush.msra.mxu0 0.0
        %760 = vmatpush.msra.mxu0 0.0
        %761 = vmatpush.msra.mxu0 0.0
        %762 = vmatpush.msra.mxu0 0.0
        %763 = vmatpush.msra.mxu0 %v743
        %764 = vmatpush.msra.mxu0 %v741
        %765 = vmatmul.f32.gmra.mxu0 %v747
        %v766 = vpop.f32.mrf.mxu0
        %v767 = vadd.f32 0.0, %v766
        %768 = vdwg.mxu0
        %769 = vrot.lane.b32.xlu0 %v533, 112
        %v770 = vpop.permute.xlu0 %769
        %771 = vrot.lane.b32.xlu0 %v563, 112
        %v772 = vpop.permute.xlu0 %771
        %773 = vrot.lane.b32.xlu0 %v566, 112
        %v774 = vpop.permute.xlu0 %773
        %v775 = vsel %vm601, %v770, 0
        %v777 = vsel %vm601, %v772, 0
        %v779 = vsel %vm601, %v774, 0
        %781 = vmatpush.xpose.msra.mxu0 0.0
        %782 = vmatpush.xpose.msra.mxu0 0.0
        %783 = vmatpush.xpose.msra.mxu0 0.0
        %784 = vmatpush.xpose.msra.mxu0 0.0
        %785 = vmatpush.xpose.msra.mxu0 0.0
        %786 = vmatpush.xpose.msra.mxu0 0.0
        %787 = vmatpush.xpose.msra.mxu0 0.0
        %788 = vmatpush.xpose.msra.mxu0 0.0
        %789 = vmatpush.xpose.msra.mxu0 0.0
        %790 = vmatpush.xpose.msra.mxu0 0.0
        %791 = vmatpush.xpose.msra.mxu0 0.0
        %792 = vmatpush.xpose.msra.mxu0 0.0
        %793 = vmatpush.xpose.msra.mxu0 0.0
        %794 = vmatpush.xpose.msra.mxu0 0.0
        %795 = vmatpush.xpose.msra.mxu0 %v779
        %796 = vmatpush.xpose.msra.mxu0 %v777
        %797 = vmatmul.f32.gmra.mxu0 %v775
        %v798 = vpop.f32.mrf.mxu0
        %v799 = vadd.f32 0.0, %v798
        %800 = vdwg.mxu0
        %v801 = vsel %vm631, %v799, -inf
        %802 = vmax.xlane.f32.xlu0 %v801
        %v803 = vpop.xlane.xlu0 %802
        %v804 = vsub.f32 %v799, %v803
        %v805 = vmul.f32 %v804, 1.442695
        %v806 = vpow.pop %v805
        %v807 = vsel %vm631, %v806, 0.0
        %808 = vadd.xlane.f32.xlu0 %v807
        %v809 = vpop.xlane.xlu0 %808
        %v810 = vrcp.pop %v809
        %v811 = vmul.f32 %v809, %v810
        %v812 = vsub.f32 1.0, %v811
        %v813 = vmul.f32 %v810, %v812
        %v814 = vadd.f32 %v810, %v813
        %vm815 = vweird.f32 %v809
        %vm816 = vweird.f32 %v810
        %vm817 = vmor %vm815, %vm816
        %v818 = vsel %vm817, %v810, %v814
        %v819 = vand.u32 2147483647, %v809
        %vm820 = vcmp.eq.f32.partialorder %v819, 8.507059e+37
        %v821 = vand.u32 %v809, 2147483648
        %v822 = vor.u32 1.1754944e-38, %v821
        %v823 = vsel %vm820, %v822, %v818
        %v824 = vmul.f32 %v806, %v823
        %s825 = scalar_lea.vmem %s403, 16 [#allocation4]
        %826 = vst.msk [vmem:[%s825] sm:$0xff] %vm631, %v824
        %827 = vrot.lane.b32.xlu0 %v596, 112
        %v828 = vpop.permute.xlu0 %827
        %829 = vrot.lane.b32.xlu0 %v599, 112
        %v830 = vpop.permute.xlu0 %829
        %v834 = vsel %vm631, %v824, 0
        %836 = vmatpush.msra.mxu0 0.0
        %837 = vmatpush.msra.mxu0 0.0
        %838 = vmatpush.msra.mxu0 0.0
        %839 = vmatpush.msra.mxu0 0.0
        %840 = vmatpush.msra.mxu0 0.0
        %841 = vmatpush.msra.mxu0 0.0
        %842 = vmatpush.msra.mxu0 0.0
        %843 = vmatpush.msra.mxu0 0.0
        %844 = vmatpush.msra.mxu0 0.0
        %845 = vmatpush.msra.mxu0 0.0
        %846 = vmatpush.msra.mxu0 0.0
        %847 = vmatpush.msra.mxu0 0.0
        %848 = vmatpush.msra.mxu0 0.0
        %849 = vmatpush.msra.mxu0 0.0
        %850 = vmatpush.msra.mxu0 %v830
        %851 = vmatpush.msra.mxu0 %v828
        %852 = vmatmul.f32.gmra.mxu0 %v834
        %v853 = vpop.f32.mrf.mxu0
        %v854 = vadd.f32 0.0, %v853
        %855 = vdwg.mxu0
        %856 = vrot.lane.b32.xlu0 %v533, 104
        %v857 = vpop.permute.xlu0 %856
        %858 = vrot.lane.b32.xlu0 %v563, 104
        %v859 = vpop.permute.xlu0 %858
        %860 = vrot.lane.b32.xlu0 %v566, 104
        %v861 = vpop.permute.xlu0 %860
        %v862 = vsel %vm601, %v857, 0
        %v864 = vsel %vm601, %v859, 0
        %v866 = vsel %vm601, %v861, 0
        %868 = vmatpush.xpose.msra.mxu0 0.0
        %869 = vmatpush.xpose.msra.mxu0 0.0
        %870 = vmatpush.xpose.msra.mxu0 0.0
        %871 = vmatpush.xpose.msra.mxu0 0.0
        %872 = vmatpush.xpose.msra.mxu0 0.0
        %873 = vmatpush.xpose.msra.mxu0 0.0
        %874 = vmatpush.xpose.msra.mxu0 0.0
        %875 = vmatpush.xpose.msra.mxu0 0.0
        %876 = vmatpush.xpose.msra.mxu0 0.0
        %877 = vmatpush.xpose.msra.mxu0 0.0
        %878 = vmatpush.xpose.msra.mxu0 0.0
        %879 = vmatpush.xpose.msra.mxu0 0.0
        %880 = vmatpush.xpose.msra.mxu0 0.0
        %881 = vmatpush.xpose.msra.mxu0 0.0
        %882 = vmatpush.xpose.msra.mxu0 %v866
        %883 = vmatpush.xpose.msra.mxu0 %v864
        %884 = vmatmul.f32.gmra.mxu0 %v862
        %v885 = vpop.f32.mrf.mxu0
        %v886 = vadd.f32 0.0, %v885
        %887 = vdwg.mxu0
        %v888 = vsel %vm631, %v886, -inf
        %889 = vmax.xlane.f32.xlu0 %v888
        %v890 = vpop.xlane.xlu0 %889
        %v891 = vsub.f32 %v886, %v890
        %v892 = vmul.f32 %v891, 1.442695
        %v893 = vpow.pop %v892
        %v894 = vsel %vm631, %v893, 0.0
        %895 = vadd.xlane.f32.xlu0 %v894
        %v896 = vpop.xlane.xlu0 %895
        %v897 = vrcp.pop %v896
        %v898 = vmul.f32 %v896, %v897
        %v899 = vsub.f32 1.0, %v898
        %v900 = vmul.f32 %v897, %v899
        %v901 = vadd.f32 %v897, %v900
        %vm902 = vweird.f32 %v896
        %vm903 = vweird.f32 %v897
        %vm904 = vmor %vm902, %vm903
        %v905 = vsel %vm904, %v897, %v901
        %v906 = vand.u32 2147483647, %v896
        %vm907 = vcmp.eq.f32.partialorder %v906, 8.507059e+37
        %v908 = vand.u32 %v896, 2147483648
        %v909 = vor.u32 1.1754944e-38, %v908
        %v910 = vsel %vm907, %v909, %v905
        %v911 = vmul.f32 %v893, %v910
        %s912 = scalar_lea.vmem %s403, 24 [#allocation4]
        %913 = vst.msk [vmem:[%s912] sm:$0xff] %vm631, %v911
        %914 = vrot.lane.b32.xlu0 %v596, 104
        %v915 = vpop.permute.xlu0 %914
        %916 = vrot.lane.b32.xlu0 %v599, 104
        %v917 = vpop.permute.xlu0 %916
        %v921 = vsel %vm631, %v911, 0
        %923 = vmatpush.msra.mxu0 0.0
        %924 = vmatpush.msra.mxu0 0.0
        %925 = vmatpush.msra.mxu0 0.0
        %926 = vmatpush.msra.mxu0 0.0
        %927 = vmatpush.msra.mxu0 0.0
        %928 = vmatpush.msra.mxu0 0.0
        %929 = vmatpush.msra.mxu0 0.0
        %930 = vmatpush.msra.mxu0 0.0
        %931 = vmatpush.msra.mxu0 0.0
        %932 = vmatpush.msra.mxu0 0.0
        %933 = vmatpush.msra.mxu0 0.0
        %934 = vmatpush.msra.mxu0 0.0
        %935 = vmatpush.msra.mxu0 0.0
        %936 = vmatpush.msra.mxu0 0.0
        %937 = vmatpush.msra.mxu0 %v917
        %938 = vmatpush.msra.mxu0 %v915
        %939 = vmatmul.f32.gmra.mxu0 %v921
        %v940 = vpop.f32.mrf.mxu0
        %v941 = vadd.f32 0.0, %v940
        %942 = vdwg.mxu0
        %944 = vrot.lane.b32.xlu0 %v767, 8
        %v945 = vpop.permute.xlu0 %944
        %948 = vrot.lane.b32.xlu0 %v854, 16
        %v949 = vpop.permute.xlu0 %948
        %952 = vrot.lane.b32.xlu0 %v941, 24
        %v953 = vpop.permute.xlu0 %952
        %v955 = vsel %vm601, %v678, %v945
        %v956 = vsel %vm631, %v955, %v949
        %vm957 = vcmask 195584
        %v958 = vsel %vm957, %v956, %v953
        %v959 = vld [vmem:[%s5] sm:$0xff]
        %v960 = vld [vmem:[%s5 + $0x8] sm:$0xff]
        %v961 = vld [vmem:[%s5 + $0x10] sm:$0xff]
        %v962 = vld [vmem:[%s5 + $0x18] sm:$0xff]
        %v963 = vperm.slane %v416, 6
        %v965 = vsel %vm418, %v958, 0
        %967 = vmatpush.msra.mxu0 0.0
        %968 = vmatpush.msra.mxu0 0.0
        %969 = vmatpush.msra.mxu0 0.0
        %970 = vmatpush.msra.mxu0 0.0
        %971 = vmatpush.msra.mxu0 0.0
        %972 = vmatpush.msra.mxu0 0.0
        %973 = vmatpush.msra.mxu0 0.0
        %974 = vmatpush.msra.mxu0 0.0
        %975 = vmatpush.msra.mxu0 0.0
        %976 = vmatpush.msra.mxu0 0.0
        %977 = vmatpush.msra.mxu0 0.0
        %978 = vmatpush.msra.mxu0 0.0
        %979 = vmatpush.msra.mxu0 %v962
        %980 = vmatpush.msra.mxu0 %v961
        %981 = vmatpush.msra.mxu0 %v960
        %982 = vmatpush.msra.mxu0 %v959
        %983 = vmatmul.f32.gmra.mxu0 %v965
        %v984 = vpop.f32.mrf.mxu0
        %v985 = vadd.f32 %v963, %v984
        %986 = vdwg.mxu0
        %v987 = vperm.slane %v416, 7
        %v988 = vmul.f32 %v987, %v985
        %v989 = vadd.f32 %v413, %v988
        %v990 = vsel %vm418, %v989, 0.0
        %991 = vadd.xlane.f32.xlu0 %v990
        %v992 = vpop.xlane.xlu0 %991
        %v993 = vmul.f32 %v992, %v428
        %v994 = vsub.f32 %v989, %v993
        %v995 = vmul.f32 %v994, %v994
        %v996 = vsel %vm418, %v995, 0.0
        %997 = vadd.xlane.f32.xlu0 %v996
        %v998 = vpop.xlane.xlu0 %997
        %v999 = vmul.f32 %v998, %v428
        %v1000 = vadd.f32 %v999, 1e-05
        %v1001 = vrsqrt.pop %v1000
        %v1002 = vmul.f32 %v1001, %v1000
        %v1003 = vmul.f32 %v1002, %v1001
        %v1004 = vmul.f32 0.5, %v1003
        %v1005 = vsub.f32 1.5, %v1004
        %v1006 = vmul.f32 %v1001, %v1005
        %vm1007 = vweird.f32 %v1000
        %vm1008 = vweird.f32 %v1001
        %vm1009 = vmor %vm1007, %vm1008
        %v1010 = vsel %vm1009, %v1001, %v1006
        %v1011 = vmul.f32 %v994, %v1010
        %v1012 = vperm.slane %v417, 0
        %v1013 = vmul.f32 %v1011, %v1012
        %v1014 = vperm.slane %v417, 1
        %v1015 = vadd.f32 %v1013, %v1014
        %v1016 = vld [vmem:[%s6] sm:$0xff]
        %v1017 = vld [vmem:[%s6 + $0x8] sm:$0xff]
        %v1018 = vld [vmem:[%s6 + $0x10] sm:$0xff]
        %v1019 = vld [vmem:[%s6 + $0x18] sm:$0xff]
        %v1020 = vld [vmem:[%s7] sm:$0x1]
        %v1022 = vperm.slane %v1020, 0
        %v1025 = vsel %vm418, %v1015, 0
        %1027 = vmatpush.msra.mxu0 0.0
        %1028 = vmatpush.msra.mxu0 0.0
        %1029 = vmatpush.msra.mxu0 0.0
        %1030 = vmatpush.msra.mxu0 0.0
        %1031 = vmatpush.msra.mxu0 0.0
        %1032 = vmatpush.msra.mxu0 0.0
        %1033 = vmatpush.msra.mxu0 0.0
        %1034 = vmatpush.msra.mxu0 0.0
        %1035 = vmatpush.msra.mxu0 0.0
        %1036 = vmatpush.msra.mxu0 0.0
        %1037 = vmatpush.msra.mxu0 0.0
        %1038 = vmatpush.msra.mxu0 0.0
        %1039 = vmatpush.msra.mxu0 %v1019
        %1040 = vmatpush.msra.mxu0 %v1018
        %1041 = vmatpush.msra.mxu0 %v1017
        %1042 = vmatpush.msra.mxu0 %v1016
        %1043 = vmatmul.f32.gmra.mxu0 %v1025
        %v1044 = vpop.f32.mrf.mxu0
        %v1045 = vadd.f32 %v1022, %v1044
        %1046 = vdwg.mxu0
        %v1047 = vmul.f32 %v1045, %v1045
        %v1048 = vmul.f32 %v1045, %v1047
        %v1049 = vmul.f32 %v1048, 0.044715
        %v1050 = vadd.f32 %v1045, %v1049
        %v1051 = vmul.f32 %v1050, 0.7978846
        %v1052 = vtanh.pop %v1051
        %v1053 = vadd.f32 %v1052, 1.0
        %v1054 = vmul.f32 %v1053, 0.5
        %v1055 = vmul.f32 %v1045, %v1054
        %v1056 = vld [vmem:[%s8] sm:$0xff]
        %v1057 = vld [vmem:[%s8 + $0x8] sm:$0xff]
        %v1058 = vld [vmem:[%s8 + $0x10] sm:$0xff]
        %v1059 = vld [vmem:[%s8 + $0x18] sm:$0xff]
        %v1060 = vld [vmem:[%s8 + $0x20] sm:$0xff]
        %v1061 = vld [vmem:[%s8 + $0x28] sm:$0xff]
        %v1062 = vld [vmem:[%s8 + $0x30] sm:$0xff]
        %v1063 = vld [vmem:[%s8 + $0x38] sm:$0xff]
        %v1064 = vld [vmem:[%s8 + $0x40] sm:$0xff]
        %v1065 = vld [vmem:[%s8 + $0x48] sm:$0xff]
        %v1066 = vld [vmem:[%s8 + $0x50] sm:$0xff]
        %v1067 = vld [vmem:[%s8 + $0x58] sm:$0xff]
        %v1068 = vld [vmem:[%s8 + $0x60] sm:$0xff]
        %v1069 = vld [vmem:[%s8 + $0x68] sm:$0xff]
        %v1070 = vld [vmem:[%s8 + $0x70] sm:$0xff]
        %v1071 = vld [vmem:[%s8 + $0x78] sm:$0xff]
        %v1072 = vperm.slane %v417, 2
        %1073 = vmatpush.msra.mxu0 %v1071
        %1074 = vmatpush.msra.mxu0 %v1070
        %1075 = vmatpush.msra.mxu0 %v1069
        %1076 = vmatpush.msra.mxu0 %v1068
        %1077 = vmatpush.msra.mxu0 %v1067
        %1078 = vmatpush.msra.mxu0 %v1066
        %1079 = vmatpush.msra.mxu0 %v1065
        %1080 = vmatpush.msra.mxu0 %v1064
        %1081 = vmatpush.msra.mxu0 %v1063
        %1082 = vmatpush.msra.mxu0 %v1062
        %1083 = vmatpush.msra.mxu0 %v1061
        %1084 = vmatpush.msra.mxu0 %v1060
        %1085 = vmatpush.msra.mxu0 %v1059
        %1086 = vmatpush.msra.mxu0 %v1058
        %1087 = vmatpush.msra.mxu0 %v1057
        %1088 = vmatpush.msra.mxu0 %v1056
        %1089 = vmatmul.f32.gmra.mxu0 %v1055
        %v1090 = vpop.f32.mrf.mxu0
        %v1091 = vadd.f32 %v1072, %v1090
        %1092 = vdwg.mxu0
        %v1093 = vperm.slane %v417, 3
        %v1094 = vmul.f32 %v1093, %v1091
        %v1095 = vadd.f32 %v1015, %v1094
        %1096 = vst.msk [vmem:[%s396] sm:$0xff] %vm418, %v1095
        %s1097 = sand.u32 %s257, 1
        %s1098 = scalar_lea.sflag [#allocation3], %s1097
        %s1099 = sand.u32 %s257, 1
        %s1100 = smul.addr %s1099, 8
        %s1101 = scalar_lea.vmem [#allocation2], %s1100
        %s1102 = sand.u32 %s283, 1
        %s1103 = scalar_lea.sflag [#allocation5], %s1102
        %s1104 = sand.u32 %s283, 1
        %s1105 = smul.addr %s1104, 32
        %s1106 = scalar_lea.vmem [#allocation4], %s1105
        // Predicated region
        $region61: #{regressor_block_forward.1} parent=59 // pred_check
          %p1107 = pneg %p267
        $region62: #{regressor_block_forward.1} parent=59 // pred_check_branch
          %1109 = sbr.rel (%p1107) target = $region64
        $region63: #{regressor_block_forward.1} parent=59 // pred_region
          %1111 = vsyncadd %s1098, 0
          %s1112 = smul.addr %s29, 8
          %s1113 = scalar_lea.hbm %s10, %s1112
          %s1115 = sshll.u32 %s1101, 4
          %s1116 = int_to_ptr.vmem [resolvable:$true] %s1115
          %s1117 = sshll.u32 %s1113, 4
          %s1118 = int_to_ptr.hbm [resolvable:$true] %s1117
          %1120 = dma.vmem_to_hbm [thread:$0]  %s1116, 128, %s1118, %s1098
        $region64: #{regressor_block_forward.1} parent=59 // pred_fallthru
          _
        // Predicated region
        $region65: #{regressor_block_forward.1} parent=59 // pred_check
          %p1121 = pneg %p293
        $region66: #{regressor_block_forward.1} parent=59 // pred_check_branch
          %1123 = sbr.rel (%p1121) target = $region68
        $region67: #{regressor_block_forward.1} parent=59 // pred_region
          %1125 = vsyncadd %s1103, 0
          %s1126 = smul.addr %s29, 4
          %s1127 = smul.addr %s1126, 8
          %s1128 = scalar_lea.hbm %s11, %s1127
          %s1129 = sshll.u32 %s1106, 4
          %s1130 = int_to_ptr.vmem [resolvable:$true] %s1129
          %s1131 = sshll.u32 %s1128, 4
          %s1132 = int_to_ptr.hbm [resolvable:$true] %s1131
          %1137 = dma.vmem_to_hbm [thread:$0]  %s1130, 512, %s1132, %s1103, 128, 128, 8
        $region68: #{regressor_block_forward.1} parent=59 // pred_fallthru
          _
      $region60: #{regressor_block_forward.1} parent=5 // pred_fallthru
        _
      %p1138 = scmp.le.s32.totalorder 2, %s24
      // Predicated region
      $region69: #{regressor_block_forward.1} parent=5 // pred_check
        %p1139 = pneg %p1138
      $region70: #{regressor_block_forward.1} parent=5 // pred_check_branch
        %1141 = sbr.rel (%p1139) target = $region72
      $region71: #{regressor_block_forward.1} parent=5 // pred_region
        %s1142 = ssub.s32 %s24, 2
        // Predicated region
        $region73: #{regressor_block_forward.1} parent=71 // pred_check
          %p1143 = pneg %p273
        $region74: #{regressor_block_forward.1} parent=71 // pred_check_branch
          %1145 = sbr.rel (%p1143) target = $region76
        $region75: #{regressor_block_forward.1} parent=71 // pred_region
          %s1146 = sand.u32 %s258, 1
          %s1147 = scalar_lea.sflag [#allocation3], %s1146
          %s1148 = sand.u32 %s258, 1
          %s1149 = smul.addr %s1148, 8
          %s1150 = scalar_lea.vmem [#allocation2], %s1149
          %1152 = dma.done %s1147, 128
        $region76: #{regressor_block_forward.1} parent=71 // pred_fallthru
          _
        // Predicated region
        $region77: #{regressor_block_forward.1} parent=71 // pred_check
          %p1153 = pneg %p299
        $region78: #{regressor_block_forward.1} parent=71 // pred_check_branch
          %1155 = sbr.rel (%p1153) target = $region80
        $region79: #{regressor_block_forward.1} parent=71 // pred_region
          %s1156 = sand.u32 %s284, 1
          %s1157 = scalar_lea.sflag [#allocation5], %s1156
          %s1158 = sand.u32 %s284, 1
          %s1159 = smul.addr %s1158, 32
          %s1160 = scalar_lea.vmem [#allocation4], %s1159
          %1162 = dma.done %s1157, 512
        $region80: #{regressor_block_forward.1} parent=71 // pred_fallthru
          _
      $region72: #{regressor_block_forward.1} parent=5 // pred_fallthru
        _
    $region6: #{regressor_block_forward.1} parent=1 // loop_footer
      %s28 = sadd.s32 1, %s24
    $region7: #{regressor_block_forward.1} parent=1 // loop_footer_branch
      %23 = sbr.rel target = $region3
    $region8: #{regressor_block_forward.1} parent=1 // loop_exit
      _
    %1163 = vsyncpa [#allocation3], 1
    %s1164 = scalar_lea.sflag [#allocation3], 1
    %1165 = vsyncpa %s1164, 1
    %1166 = vsyncpa [#allocation5], 1
    %s1167 = scalar_lea.sflag [#allocation5], 1
    %1168 = vsyncpa %s1167, 1

</llo_original>
